<compile_context>
chip_gen: v5e
topology: v5e:2x2
jax: 0.10.0
libtpu: 0.0.40
codegen_flags: <defaults>
</compile_context>

<pallas_src>
import math

import jax
import jax.numpy as jnp
from jax.experimental import pallas as pl
from jax.experimental.pallas import tpu as pltpu


# ---------------------------------------------------------------------------
# Pallas kernel: one post-norm TransformerEncoderLayer (nhead=1) per batch tile
# ---------------------------------------------------------------------------
def encoder_layer_kernel(
    x_ref, kpm_ref, bdm_ref,
    wqkv_ref, bqkv_ref,
    wo_ref, bo_ref,
    ln1w_ref, ln1b_ref,
    w1_ref, b1_ref, w2_ref, b2_ref,
    ln2w_ref, ln2b_ref,
    o_ref,
):
    TB, S, D = x_ref.shape
    R = TB * S

    x_bf = x_ref[...].reshape(R, D)            # (R, D) bf16 streamed activations
    x32 = x_bf.astype(jnp.float32)             # f32 copy for residual / LayerNorm

    def layer_norm(h, w, b):
        # two-pass (centered) variance in f32: matches the reference formula
        mu = jnp.mean(h, axis=-1, keepdims=True)
        c = h - mu
        var = jnp.mean(c * c, axis=-1, keepdims=True)
        return c * jax.lax.rsqrt(var + 1e-5) * w + b

    # --- fused QKV projection (1/sqrt(D) pre-folded into the Q columns) -----
    qkv = jnp.dot(x_bf, wqkv_ref[...],
                  preferred_element_type=jnp.float32) + bqkv_ref[...]
    q = qkv[:, 0 * D:1 * D].astype(jnp.bfloat16)
    k = qkv[:, 1 * D:2 * D].astype(jnp.bfloat16)
    v = qkv[:, 2 * D:3 * D].astype(jnp.bfloat16)

    # --- packed block-diagonal attention: one (R, R) score matmul -----------
    # contract q and k over the shared D axis (no explicit k.T materialization)
    scores = jax.lax.dot_general(q, k, (((1,), (1,)), ((), ())),
                                 preferred_element_type=jnp.float32)
    # constant block-diagonal mask (cross-batch) + per-tile key-padding mask
    scores = scores + bdm_ref[...] + kpm_ref[0]

    m = jnp.max(scores, axis=-1, keepdims=True)
    p = jnp.exp(scores - m)
    l = jnp.sum(p, axis=-1, keepdims=True)     # (R, 1)

    ctx = jnp.dot(p.astype(jnp.bfloat16), v,
                  preferred_element_type=jnp.float32)
    # normalize AFTER p@v: (R, D) multiply with an EUP approx reciprocal
    ctx = ctx * pl.reciprocal(l, approx=True)

    attn = jnp.dot(ctx.astype(jnp.bfloat16), wo_ref[...],
                   preferred_element_type=jnp.float32) + bo_ref[...]

    # --- residual + LayerNorm 1 ----------------------------------------------
    h = layer_norm(x32 + attn, ln1w_ref[...], ln1b_ref[...])

    # --- feed-forward: linear -> fused bias+ReLU+bf16 downcast -> linear ----
    f = jnp.dot(h.astype(jnp.bfloat16), w1_ref[...],
                preferred_element_type=jnp.float32) + b1_ref[...]
    f = jnp.maximum(f, 0.0).astype(jnp.bfloat16)   # dff-wide intermediate in bf16
    f = jnp.dot(f, w2_ref[...],
                preferred_element_type=jnp.float32) + b2_ref[...]

    # --- residual + LayerNorm 2 ----------------------------------------------
    o_ref[...] = layer_norm(h + f, ln2w_ref[...], ln2b_ref[...]).reshape(TB, S, D)


# ---------------------------------------------------------------------------
# Wrapper helpers
# ---------------------------------------------------------------------------
def create_positional_encoding(dim, max_len):
    position = jnp.arange(max_len, dtype=jnp.float32)[:, None]
    div_term = jnp.exp(
        jnp.arange(0, dim, 2, dtype=jnp.float32) * (-math.log(10000.0) / dim)
    )
    pe = jnp.zeros((max_len, dim), dtype=jnp.float32)
    pe = pe.at[:, 0::2].set(jnp.sin(position * div_term))
    pe = pe.at[:, 1::2].set(jnp.cos(position * div_term))
    return pe[None]  # (1, max_len, dim)


def _vmem_budget_bytes():
    """Generation-aware scoped-VMEM budget (conservative v7x fallback)."""
    phys = 64 * 1024 * 1024                      # v7x per-TensorCore VMEM
    try:
        info = pltpu.get_tpu_info()
        phys = int(getattr(info, "vmem_capacity_bytes", phys))
    except Exception:
        pass
    return min(int(phys * 3 // 4), 96 * 1024 * 1024)


def _tile_vmem_bytes(tb, S, D, dff):
    """Rough per-step VMEM footprint: streamed tiles (x2 buffers) + resident
    constants (x1 buffer) + the widest in-body f32 temporaries."""
    R = tb * S
    streamed = 2 * (R * D * 2) + 2 * (R * D * 4) + 2 * (R * 4)       # x bf16, out f32, keypad
    resident = (R * R * 4                                             # block-diag mask
                + 2 * (3 * D * D + D * D + 2 * D * dff)               # bf16 weights
                + 4 * (3 * D + 6 * D + dff))                          # f32 biases / LN params
    temps = 4 * (3 * R * D + 2 * R * R + R * dff + 4 * R * D)         # qkv, scores+p, ffn, x32/h/ctx/attn
    return streamed + resident + temps


def _pick_batch_tile(B, S, target_rows=512):
    """Largest divisor of B with TB*S <= target_rows (MXU row fill vs VMEM /
    packed-attention waste)."""
    best = 1
    for tb in range(1, B + 1):
        if B % tb == 0 and tb * S <= max(target_rows, S):
            best = tb
    # Prefer an even grid (>= 2 steps) for the v7x 2-TensorCore 'parallel'
    # axis, but only if the slab keeps >= 256 MXU rows.
    if best == B and B > 1:
        for tb in range(B // 2, 0, -1):
            if B % tb == 0 and tb * S >= 256 and (B // tb) % 2 == 0:
                best = tb
                break
    return best


# ---------------------------------------------------------------------------
# Wrapper: embedding / positional encoding glue + pallas_call
# ---------------------------------------------------------------------------
def smiles_transformer_encoder(input_ids, attention_mask, kp, pe, *,
                               batch_tile=None, single_buffer_weights=True):
    """Forward pass. input_ids (B,S) int32, attention_mask (B,S) bool (True=pad)."""
    B, S = input_ids.shape
    D = kp["wq"].shape[0]
    dff = kp["w1"].shape[1]

    budget = _vmem_budget_bytes()
    TB = _pick_batch_tile(B, S) if batch_tile is None else batch_tile
    assert B % TB == 0, "batch_tile must divide the batch size"
    # shrink the batch tile until the estimated footprint fits the VMEM budget
    while TB > 1 and _tile_vmem_bytes(TB, S, D, dff) > budget:
        TB = max(d for d in range(1, TB) if B % d == 0)
    R = TB * S

    # Glue: embedding lookup, scale, positional encoding (requires S == max_len,
    # exactly as the PyTorch broadcast `x += pe[: x.size(1)]` requires).
    # Activations streamed in bf16 (HBM traffic / VMEM); f32 math inside kernel.
    x = (kp["emb"][input_ids] * math.sqrt(D) + pe[0]).astype(jnp.bfloat16)  # (B,S,D)

    # Additive key-padding mask, flattened per batch tile: (B//TB, 1, TB*S).
    # (Fully-padded sequences would get uniform attention over padding because
    # the mask is a finite -1e30; PyTorch would produce NaN there.)
    add_mask = jnp.where(attention_mask, -1e30, 0.0).astype(jnp.float32)    # (B, S)
    kpm = add_mask.reshape(B // TB, 1, R)

    # Constant block-diagonal mask restricting the packed (R, R) attention to
    # within-sequence blocks. Identical for every grid step -> single-buffered.
    rid = jnp.arange(R, dtype=jnp.int32) // S
    bdm = jnp.where(rid[:, None] == rid[None, :], 0.0, -1e30).astype(jnp.float32)

    # Fused QKV weight/bias; fold the 1/sqrt(D) score scale into the Q columns.
    scale = 1.0 / math.sqrt(D)
    wqkv = jnp.concatenate([kp["wq"] * scale, kp["wk"], kp["wv"]], axis=1)
    bqkv = jnp.concatenate([kp["bq"] * scale, kp["bk"], kp["bv"]], axis=1)

    # bf16 MXU operands (f32 accumulation inside the kernel); biases stay f32.
    wqkv = wqkv.astype(jnp.bfloat16)
    wo = kp["wo"].astype(jnp.bfloat16)
    w1 = kp["w1"].astype(jnp.bfloat16)
    w2 = kp["w2"].astype(jnp.bfloat16)

    # Constant (grid-invariant) blocks: single-buffer to halve their VMEM cost.
    def wspec(shape):
        if single_buffer_weights:
            return pl.BlockSpec(shape, lambda b: (0,) * len(shape),
                                pipeline_mode=pl.Buffered(1))
        return pl.BlockSpec(shape, lambda b: (0,) * len(shape))

    in_specs = [
        pl.BlockSpec((TB, S, D), lambda b: (b, 0, 0)),   # x (bf16 streamed)
        pl.BlockSpec((1, 1, R), lambda b: (b, 0, 0)),    # key-padding mask tile
        wspec((R, R)),                                   # block-diagonal mask
        wspec((D, 3 * D)), wspec((1, 3 * D)),            # fused wqkv, bqkv
        wspec((D, D)), wspec((1, D)),                    # wo, bo
        wspec((1, D)), wspec((1, D)),                    # ln1w, ln1b
        wspec((D, dff)), wspec((1, dff)),                # w1, b1
        wspec((dff, D)), wspec((1, D)),                  # w2, b2
        wspec((1, D)), wspec((1, D)),                    # ln2w, ln2b
    ]

    # Cost estimate so XLA can overlap the wrapper-side gather / PE add / mask
    # construction with the kernel instead of serializing them.
    steps = B // TB
    flops = int(steps * (2 * R * D * (3 * D + D + 2 * dff) + 4 * R * R * D))
    transcendentals = int(steps * (R * R + 3 * R))
    bytes_accessed = int(B * S * D * (2 + 4)
                         + steps * R * 4 + R * R * 4
                         + 2 * (3 * D * D + D * D + 2 * D * dff)
                         + 4 * (3 * D + 6 * D + dff))
    cost = pl.CostEstimate(flops=flops, transcendentals=transcendentals,
                           bytes_accessed=bytes_accessed)

    vmem_limit = int(min(budget, max(32 * 1024 * 1024,
                                     2 * _tile_vmem_bytes(TB, S, D, dff))))

    out = pl.pallas_call(
        encoder_layer_kernel,
        out_shape=jax.ShapeDtypeStruct((B, S, D), jnp.float32),
        grid_spec=pltpu.PrefetchScalarGridSpec(
            num_scalar_prefetch=0,
            grid=(steps,),
            in_specs=in_specs,
            out_specs=pl.BlockSpec((TB, S, D), lambda b: (b, 0, 0)),
        ),
        compiler_params=pltpu.CompilerParams(
            dimension_semantics=("parallel",),
            vmem_limit_bytes=vmem_limit,
        ),
        cost_estimate=cost,
    )(
        x, kpm, bdm,
        wqkv, bqkv,
        wo, kp["bo"],
        kp["ln1w"], kp["ln1b"],
        w1, kp["b1"], w2, kp["b2"],
        kp["ln2w"], kp["ln2b"],
    )
    return out  # (B, S, D) — matches output.permute(1, 0, 2) of the PyTorch module


# ---------------------------------------------------------------------------
# Deterministic parameter construction (kernel layout: y = x @ W + b)
# ---------------------------------------------------------------------------
def init_params(key, vocab_size, d_model, dff):
    ks = jax.random.split(key, 8)
    wscale = 0.05
    in_proj_w = jax.random.normal(ks[0], (3 * d_model, d_model), jnp.float32) * wscale
    in_proj_b = jax.random.normal(ks[1], (3 * d_model,), jnp.float32) * wscale
    out_proj_w = jax.random.normal(ks[2], (d_model, d_model), jnp.float32) * wscale
    w1_pt = jax.random.normal(ks[3], (dff, d_model), jnp.float32) * wscale  # (out, in)
    b1_pt = jax.random.normal(ks[4], (dff,), jnp.float32) * wscale
    w2_pt = jax.random.normal(ks[5], (d_model, dff), jnp.float32) * wscale
    b2_pt = jax.random.normal(ks[6], (d_model,), jnp.float32) * wscale
    emb = jax.random.normal(ks[7], (vocab_size, d_model), jnp.float32) * 0.3

    D = d_model
    return {
        "emb": emb,
        "wq": in_proj_w[0 * D:1 * D].T, "bq": in_proj_b[0 * D:1 * D][None, :],
        "wk": in_proj_w[1 * D:2 * D].T, "bk": in_proj_b[1 * D:2 * D][None, :],
        "wv": in_proj_w[2 * D:3 * D].T, "bv": in_proj_b[2 * D:3 * D][None, :],
        "wo": out_proj_w.T, "bo": jnp.zeros((1, D), jnp.float32),
        "ln1w": jnp.ones((1, D), jnp.float32), "ln1b": jnp.zeros((1, D), jnp.float32),
        "w1": w1_pt.T, "b1": b1_pt[None, :],
        "w2": w2_pt.T, "b2": b2_pt[None, :],
        "ln2w": jnp.ones((1, D), jnp.float32), "ln2b": jnp.zeros((1, D), jnp.float32),
    }


# ---------------------------------------------------------------------------
# Pure-JAX f32 reference (mirrors PyTorch eval-mode TransformerEncoderLayer)
# ---------------------------------------------------------------------------
def reference_forward(input_ids, attention_mask, kp, pe):
    D = kp["wq"].shape[0]
    x = kp["emb"][input_ids] * math.sqrt(D) + pe[0]
    add_mask = jnp.where(attention_mask, -1e30, 0.0)[:, None, :]

    def ln(h, w, b):
        mu = jnp.mean(h, -1, keepdims=True)
        var = jnp.mean((h - mu) ** 2, -1, keepdims=True)
        return (h - mu) / jnp.sqrt(var + 1e-5) * w + b

    q = x @ kp["wq"] + kp["bq"][0]
    k = x @ kp["wk"] + kp["bk"][0]
    v = x @ kp["wv"] + kp["bv"][0]
    s = jnp.einsum("bqd,bkd->bqk", q, k) / math.sqrt(D) + add_mask
    p = jax.nn.softmax(s, axis=-1)
    a = jnp.einsum("bqk,bkd->bqd", p, v) @ kp["wo"] + kp["bo"][0]
    h = ln(x + a, kp["ln1w"][0], kp["ln1b"][0])
    f = jnp.maximum(h @ kp["w1"] + kp["b1"][0], 0.0) @ kp["w2"] + kp["b2"][0]
    return ln(h + f, kp["ln2w"][0], kp["ln2b"][0])


if __name__ == "__main__":
    # Small shapes consistent with the module (max_len == seq len, as required
    # by the module's positional-encoding broadcast). D, dff multiples of 128
    # keep the kernel outputs and fused-QKV slices lane-dense / lane-aligned.
    B, S, D, DFF, VOCAB = 4, 8, 128, 256, 24

    key = jax.random.PRNGKey(0)
    k_ids, k_par = jax.random.split(key)

    input_ids = jax.random.randint(k_ids, (B, S), 0, VOCAB, dtype=jnp.int32)
    attention_mask = jnp.zeros((B, S), dtype=bool).at[:, S - 2:].set(True)  # last 2 = pad

    params = init_params(k_par, VOCAB, D, DFF)
    pe = create_positional_encoding(D, S)

    def run(single_buffer_weights):
        o = smiles_transformer_encoder(input_ids, attention_mask, params, pe,
                                        single_buffer_weights=single_buffer_weights)
        return jax.block_until_ready(o)

    try:
        out = run(True)          # preferred: single-buffered constant weights
    except Exception:
        out = run(False)         # fallback if this jax build rejects pl.Buffered(1)

    ref = reference_forward(input_ids, attention_mask, params, pe)
    assert out.shape == (B, S, D)
    # bf16-streamed activations + bf16 MXU operands (f32 accumulation) vs f32 ref
    assert jnp.allclose(out, ref, atol=5e-2, rtol=5e-2), "mismatch vs JAX reference"

    print("KERNEL_OK")
</pallas_src>

<mosaic_0001>
module attributes {stable_mosaic.version = 11 : i64} {
  func.func @encoder_layer_kernel(%arg0: i32, %arg1: memref<4x8x128xbf16, #tpu.memory_space<vmem>>, %arg2: memref<1x1x32xf32, #tpu.memory_space<vmem>>, %arg3: memref<32x32xf32, #tpu.memory_space<vmem>>, %arg4: memref<128x384xbf16, #tpu.memory_space<vmem>>, %arg5: memref<1x384xf32, #tpu.memory_space<vmem>>, %arg6: memref<128x128xbf16, #tpu.memory_space<vmem>>, %arg7: memref<1x128xf32, #tpu.memory_space<vmem>>, %arg8: memref<1x128xf32, #tpu.memory_space<vmem>>, %arg9: memref<1x128xf32, #tpu.memory_space<vmem>>, %arg10: memref<128x256xbf16, #tpu.memory_space<vmem>>, %arg11: memref<1x256xf32, #tpu.memory_space<vmem>>, %arg12: memref<256x128xbf16, #tpu.memory_space<vmem>>, %arg13: memref<1x128xf32, #tpu.memory_space<vmem>>, %arg14: memref<1x128xf32, #tpu.memory_space<vmem>>, %arg15: memref<1x128xf32, #tpu.memory_space<vmem>>, %arg16: memref<4x8x128xf32, #tpu.memory_space<vmem>>) attributes {dimension_semantics = [#tpu.dimension_semantics<parallel>], iteration_bounds = array<i64: 1>, scalar_prefetch = 0 : i64, scratch_operands = 0 : i64, tpu.core_type = #tpu.core_type<tc>, window_params = [{transform_indices = @transform_0, window_bounds = array<i64: 4, 8, 128>}, {transform_indices = @transform_1, window_bounds = array<i64: 1, 1, 32>}, {pipeline_mode = #tpu.pipeline_mode<synchronous>, transform_indices = @transform_2, window_bounds = array<i64: 32, 32>}, {pipeline_mode = #tpu.pipeline_mode<synchronous>, transform_indices = @transform_3, window_bounds = array<i64: 128, 384>}, {pipeline_mode = #tpu.pipeline_mode<synchronous>, transform_indices = @transform_4, window_bounds = array<i64: 1, 384>}, {pipeline_mode = #tpu.pipeline_mode<synchronous>, transform_indices = @transform_5, window_bounds = array<i64: 128, 128>}, {pipeline_mode = #tpu.pipeline_mode<synchronous>, transform_indices = @transform_6, window_bounds = array<i64: 1, 128>}, {pipeline_mode = #tpu.pipeline_mode<synchronous>, transform_indices = @transform_7, window_bounds = array<i64: 1, 128>}, {pipeline_mode = #tpu.pipeline_mode<synchronous>, transform_indices = @transform_8, window_bounds = array<i64: 1, 128>}, {pipeline_mode = #tpu.pipeline_mode<synchronous>, transform_indices = @transform_9, window_bounds = array<i64: 128, 256>}, {pipeline_mode = #tpu.pipeline_mode<synchronous>, transform_indices = @transform_10, window_bounds = array<i64: 1, 256>}, {pipeline_mode = #tpu.pipeline_mode<synchronous>, transform_indices = @transform_11, window_bounds = array<i64: 256, 128>}, {pipeline_mode = #tpu.pipeline_mode<synchronous>, transform_indices = @transform_12, window_bounds = array<i64: 1, 128>}, {pipeline_mode = #tpu.pipeline_mode<synchronous>, transform_indices = @transform_13, window_bounds = array<i64: 1, 128>}, {pipeline_mode = #tpu.pipeline_mode<synchronous>, transform_indices = @transform_14, window_bounds = array<i64: 1, 128>}, {transform_indices = @transform_15, window_bounds = array<i64: 4, 8, 128>}]} {
    %c0 = arith.constant 0 : index
    %c0_0 = arith.constant 0 : index
    %c0_1 = arith.constant 0 : index
    %0 = vector.load %arg1[%c0, %c0_0, %c0_1] : memref<4x8x128xbf16, #tpu.memory_space<vmem>>, vector<4x8x128xbf16>
    %1 = vector.shape_cast %0 : vector<4x8x128xbf16> to vector<32x128xbf16>
    %2 = arith.extf %1 : vector<32x128xbf16> to vector<32x128xf32>
    %c0_2 = arith.constant 0 : index
    %c0_3 = arith.constant 0 : index
    %3 = vector.load %arg4[%c0_2, %c0_3] : memref<128x384xbf16, #tpu.memory_space<vmem>>, vector<128x384xbf16>
    %cst = arith.constant dense<0.000000e+00> : vector<32x384xf32>
    %4 = tpu.matmul %1, %3, %cst {dimension_numbers = #tpu.dot_dimension_numbers<[1], [0], [0], [1], [0, 0, 1, 1], [], []>} : vector<32x128xbf16>, vector<128x384xbf16>, vector<32x384xf32> -> vector<32x384xf32>
    %c0_4 = arith.constant 0 : index
    %c0_5 = arith.constant 0 : index
    %5 = vector.load %arg5[%c0_4, %c0_5] : memref<1x384xf32, #tpu.memory_space<vmem>>, vector<1x384xf32>
    %6 = vector.broadcast %5 : vector<1x384xf32> to vector<32x384xf32>
    %7 = arith.addf %4, %6 : vector<32x384xf32>
    %8 = vector.extract_strided_slice %7 {offsets = [0, 0], sizes = [32, 128], strides = [1, 1]} : vector<32x384xf32> to vector<32x128xf32>
    %9 = arith.truncf %8 : vector<32x128xf32> to vector<32x128xbf16>
    %10 = vector.extract_strided_slice %7 {offsets = [0, 128], sizes = [32, 128], strides = [1, 1]} : vector<32x384xf32> to vector<32x128xf32>
    %11 = arith.truncf %10 : vector<32x128xf32> to vector<32x128xbf16>
    %12 = vector.extract_strided_slice %7 {offsets = [0, 256], sizes = [32, 128], strides = [1, 1]} : vector<32x384xf32> to vector<32x128xf32>
    %13 = arith.truncf %12 : vector<32x128xf32> to vector<32x128xbf16>
    %cst_6 = arith.constant dense<0.000000e+00> : vector<32x32xf32>
    %14 = tpu.matmul %9, %11, %cst_6 {dimension_numbers = #tpu.dot_dimension_numbers<[1], [1], [0], [0], [0, 0, 1, 0], [], []>} : vector<32x128xbf16>, vector<32x128xbf16>, vector<32x32xf32> -> vector<32x32xf32>
    %c0_7 = arith.constant 0 : index
    %c0_8 = arith.constant 0 : index
    %15 = vector.load %arg3[%c0_7, %c0_8] : memref<32x32xf32, #tpu.memory_space<vmem>>, vector<32x32xf32>
    %16 = arith.addf %14, %15 : vector<32x32xf32>
    %c0_9 = arith.constant 0 : index
    %c0_10 = arith.constant 0 : index
    %c0_11 = arith.constant 0 : index
    %17 = vector.load %arg2[%c0_9, %c0_10, %c0_11] : memref<1x1x32xf32, #tpu.memory_space<vmem>>, vector<1x1x32xf32>
    %18 = vector.shape_cast %17 : vector<1x1x32xf32> to vector<1x32xf32>
    %19 = vector.broadcast %18 : vector<1x32xf32> to vector<32x32xf32>
    %20 = arith.addf %16, %19 : vector<32x32xf32>
    %cst_12 = arith.constant dense<0xFF800000> : vector<32xf32>
    %21 = vector.multi_reduction <maximumf>, %20, %cst_12 [1] : vector<32x32xf32> to vector<32xf32>
    %22 = vector.shape_cast %21 : vector<32xf32> to vector<32x1xf32>
    %23 = vector.broadcast %22 : vector<32x1xf32> to vector<32x32xf32>
    %24 = arith.subf %20, %23 : vector<32x32xf32>
    %25 = math.exp %24 : vector<32x32xf32>
    %cst_13 = arith.constant dense<0.000000e+00> : vector<32xf32>
    %26 = vector.multi_reduction <add>, %25, %cst_13 [1] : vector<32x32xf32> to vector<32xf32>
    %27 = vector.shape_cast %26 : vector<32xf32> to vector<32x1xf32>
    %28 = arith.truncf %25 : vector<32x32xf32> to vector<32x32xbf16>
    %cst_14 = arith.constant dense<0.000000e+00> : vector<32x128xf32>
    %29 = tpu.matmul %28, %13, %cst_14 {dimension_numbers = #tpu.dot_dimension_numbers<[1], [0], [0], [1], [0, 0, 1, 1], [], []>} : vector<32x32xbf16>, vector<32x128xbf16>, vector<32x128xf32> -> vector<32x128xf32>
    %30 = tpu.reciprocal %27 {approx = true} : vector<32x1xf32> -> vector<32x1xf32>
    %31 = vector.broadcast %30 : vector<32x1xf32> to vector<32x128xf32>
    %32 = arith.mulf %29, %31 : vector<32x128xf32>
    %33 = arith.truncf %32 : vector<32x128xf32> to vector<32x128xbf16>
    %c0_15 = arith.constant 0 : index
    %c0_16 = arith.constant 0 : index
    %34 = vector.load %arg6[%c0_15, %c0_16] : memref<128x128xbf16, #tpu.memory_space<vmem>>, vector<128x128xbf16>
    %cst_17 = arith.constant dense<0.000000e+00> : vector<32x128xf32>
    %35 = tpu.matmul %33, %34, %cst_17 {dimension_numbers = #tpu.dot_dimension_numbers<[1], [0], [0], [1], [0, 0, 1, 1], [], []>} : vector<32x128xbf16>, vector<128x128xbf16>, vector<32x128xf32> -> vector<32x128xf32>
    %c0_18 = arith.constant 0 : index
    %c0_19 = arith.constant 0 : index
    %36 = vector.load %arg7[%c0_18, %c0_19] : memref<1x128xf32, #tpu.memory_space<vmem>>, vector<1x128xf32>
    %37 = vector.broadcast %36 : vector<1x128xf32> to vector<32x128xf32>
    %38 = arith.addf %35, %37 : vector<32x128xf32>
    %39 = arith.addf %2, %38 : vector<32x128xf32>
    %c0_20 = arith.constant 0 : index
    %c0_21 = arith.constant 0 : index
    %40 = vector.load %arg8[%c0_20, %c0_21] : memref<1x128xf32, #tpu.memory_space<vmem>>, vector<1x128xf32>
    %c0_22 = arith.constant 0 : index
    %c0_23 = arith.constant 0 : index
    %41 = vector.load %arg9[%c0_22, %c0_23] : memref<1x128xf32, #tpu.memory_space<vmem>>, vector<1x128xf32>
    %cst_24 = arith.constant dense<0.000000e+00> : vector<32xf32>
    %42 = vector.multi_reduction <add>, %39, %cst_24 [1] : vector<32x128xf32> to vector<32xf32>
    %43 = vector.shape_cast %42 : vector<32xf32> to vector<32x1xf32>
    %cst_25 = arith.constant 1.280000e+02 : f32
    %44 = vector.broadcast %cst_25 : f32 to vector<32x1xf32>
    %45 = arith.divf %43, %44 : vector<32x1xf32>
    %46 = vector.broadcast %45 : vector<32x1xf32> to vector<32x128xf32>
    %47 = arith.subf %39, %46 : vector<32x128xf32>
    %48 = arith.mulf %47, %47 : vector<32x128xf32>
    %cst_26 = arith.constant dense<0.000000e+00> : vector<32xf32>
    %49 = vector.multi_reduction <add>, %48, %cst_26 [1] : vector<32x128xf32> to vector<32xf32>
    %50 = vector.shape_cast %49 : vector<32xf32> to vector<32x1xf32>
    %cst_27 = arith.constant 1.280000e+02 : f32
    %51 = vector.broadcast %cst_27 : f32 to vector<32x1xf32>
    %52 = arith.divf %50, %51 : vector<32x1xf32>
    %cst_28 = arith.constant 9.99999974E-6 : f32
    %53 = vector.broadcast %cst_28 : f32 to vector<32x1xf32>
    %54 = arith.addf %52, %53 : vector<32x1xf32>
    %55 = math.rsqrt %54 : vector<32x1xf32>
    %56 = vector.broadcast %55 : vector<32x1xf32> to vector<32x128xf32>
    %57 = arith.mulf %47, %56 : vector<32x128xf32>
    %58 = vector.broadcast %40 : vector<1x128xf32> to vector<32x128xf32>
    %59 = arith.mulf %57, %58 : vector<32x128xf32>
    %60 = vector.broadcast %41 : vector<1x128xf32> to vector<32x128xf32>
    %61 = arith.addf %59, %60 : vector<32x128xf32>
    %62 = arith.truncf %61 : vector<32x128xf32> to vector<32x128xbf16>
    %c0_29 = arith.constant 0 : index
    %c0_30 = arith.constant 0 : index
    %63 = vector.load %arg10[%c0_29, %c0_30] : memref<128x256xbf16, #tpu.memory_space<vmem>>, vector<128x256xbf16>
    %cst_31 = arith.constant dense<0.000000e+00> : vector<32x256xf32>
    %64 = tpu.matmul %62, %63, %cst_31 {dimension_numbers = #tpu.dot_dimension_numbers<[1], [0], [0], [1], [0, 0, 1, 1], [], []>} : vector<32x128xbf16>, vector<128x256xbf16>, vector<32x256xf32> -> vector<32x256xf32>
    %c0_32 = arith.constant 0 : index
    %c0_33 = arith.constant 0 : index
    %65 = vector.load %arg11[%c0_32, %c0_33] : memref<1x256xf32, #tpu.memory_space<vmem>>, vector<1x256xf32>
    %66 = vector.broadcast %65 : vector<1x256xf32> to vector<32x256xf32>
    %67 = arith.addf %64, %66 : vector<32x256xf32>
    %cst_34 = arith.constant 0.000000e+00 : f32
    %68 = vector.broadcast %cst_34 : f32 to vector<32x256xf32>
    %69 = arith.maximumf %67, %68 : vector<32x256xf32>
    %70 = arith.truncf %69 : vector<32x256xf32> to vector<32x256xbf16>
    %c0_35 = arith.constant 0 : index
    %c0_36 = arith.constant 0 : index
    %71 = vector.load %arg12[%c0_35, %c0_36] : memref<256x128xbf16, #tpu.memory_space<vmem>>, vector<256x128xbf16>
    %cst_37 = arith.constant dense<0.000000e+00> : vector<32x128xf32>
    %72 = tpu.matmul %70, %71, %cst_37 {dimension_numbers = #tpu.dot_dimension_numbers<[1], [0], [0], [1], [0, 0, 1, 1], [], []>} : vector<32x256xbf16>, vector<256x128xbf16>, vector<32x128xf32> -> vector<32x128xf32>
    %c0_38 = arith.constant 0 : index
    %c0_39 = arith.constant 0 : index
    %73 = vector.load %arg13[%c0_38, %c0_39] : memref<1x128xf32, #tpu.memory_space<vmem>>, vector<1x128xf32>
    %74 = vector.broadcast %73 : vector<1x128xf32> to vector<32x128xf32>
    %75 = arith.addf %72, %74 : vector<32x128xf32>
    %76 = arith.addf %61, %75 : vector<32x128xf32>
    %c0_40 = arith.constant 0 : index
    %c0_41 = arith.constant 0 : index
    %77 = vector.load %arg14[%c0_40, %c0_41] : memref<1x128xf32, #tpu.memory_space<vmem>>, vector<1x128xf32>
    %c0_42 = arith.constant 0 : index
    %c0_43 = arith.constant 0 : index
    %78 = vector.load %arg15[%c0_42, %c0_43] : memref<1x128xf32, #tpu.memory_space<vmem>>, vector<1x128xf32>
    %cst_44 = arith.constant dense<0.000000e+00> : vector<32xf32>
    %79 = vector.multi_reduction <add>, %76, %cst_44 [1] : vector<32x128xf32> to vector<32xf32>
    %80 = vector.shape_cast %79 : vector<32xf32> to vector<32x1xf32>
    %cst_45 = arith.constant 1.280000e+02 : f32
    %81 = vector.broadcast %cst_45 : f32 to vector<32x1xf32>
    %82 = arith.divf %80, %81 : vector<32x1xf32>
    %83 = vector.broadcast %82 : vector<32x1xf32> to vector<32x128xf32>
    %84 = arith.subf %76, %83 : vector<32x128xf32>
    %85 = arith.mulf %84, %84 : vector<32x128xf32>
    %cst_46 = arith.constant dense<0.000000e+00> : vector<32xf32>
    %86 = vector.multi_reduction <add>, %85, %cst_46 [1] : vector<32x128xf32> to vector<32xf32>
    %87 = vector.shape_cast %86 : vector<32xf32> to vector<32x1xf32>
    %cst_47 = arith.constant 1.280000e+02 : f32
    %88 = vector.broadcast %cst_47 : f32 to vector<32x1xf32>
    %89 = arith.divf %87, %88 : vector<32x1xf32>
    %cst_48 = arith.constant 9.99999974E-6 : f32
    %90 = vector.broadcast %cst_48 : f32 to vector<32x1xf32>
    %91 = arith.addf %89, %90 : vector<32x1xf32>
    %92 = math.rsqrt %91 : vector<32x1xf32>
    %93 = vector.broadcast %92 : vector<32x1xf32> to vector<32x128xf32>
    %94 = arith.mulf %84, %93 : vector<32x128xf32>
    %95 = vector.broadcast %77 : vector<1x128xf32> to vector<32x128xf32>
    %96 = arith.mulf %94, %95 : vector<32x128xf32>
    %97 = vector.broadcast %78 : vector<1x128xf32> to vector<32x128xf32>
    %98 = arith.addf %96, %97 : vector<32x128xf32>
    %99 = vector.shape_cast %98 : vector<32x128xf32> to vector<4x8x128xf32>
    %c0_49 = arith.constant 0 : index
    %c0_50 = arith.constant 0 : index
    %c0_51 = arith.constant 0 : index
    %100 = vector.load %arg16[%c0_49, %c0_50, %c0_51] : memref<4x8x128xf32, #tpu.memory_space<vmem>>, vector<4x8x128xf32>
    tpu.vector_store %arg16[%c0_49, %c0_50, %c0_51], %99 {strides = array<i32>} : memref<4x8x128xf32, #tpu.memory_space<vmem>>, vector<4x8x128xf32>,
    return
  }
  func.func @transform_0(%arg0: i32) -> (i32, i32, i32) {
    %c0_i32 = arith.constant 0 : i32
    %c0_i32_0 = arith.constant 0 : i32
    %c0_i32_1 = arith.constant 0 : i32
    return %arg0, %c0_i32, %c0_i32_0 : i32, i32, i32
  }
  func.func @transform_1(%arg0: i32) -> (i32, i32, i32) {
    %c0_i32 = arith.constant 0 : i32
    %c0_i32_0 = arith.constant 0 : i32
    %c0_i32_1 = arith.constant 0 : i32
    return %arg0, %c0_i32, %c0_i32_0 : i32, i32, i32
  }
  func.func @transform_2(%arg0: i32) -> (i32, i32) {
    %c0_i32 = arith.constant 0 : i32
    %c0_i32_0 = arith.constant 0 : i32
    %c0_i32_1 = arith.constant 0 : i32
    return %c0_i32, %c0_i32_0 : i32, i32
  }
  func.func @transform_3(%arg0: i32) -> (i32, i32) {
    %c0_i32 = arith.constant 0 : i32
    %c0_i32_0 = arith.constant 0 : i32
    %c0_i32_1 = arith.constant 0 : i32
    return %c0_i32, %c0_i32_0 : i32, i32
  }
  func.func @transform_4(%arg0: i32) -> (i32, i32) {
    %c0_i32 = arith.constant 0 : i32
    %c0_i32_0 = arith.constant 0 : i32
    %c0_i32_1 = arith.constant 0 : i32
    return %c0_i32, %c0_i32_0 : i32, i32
  }
  func.func @transform_5(%arg0: i32) -> (i32, i32) {
    %c0_i32 = arith.constant 0 : i32
    %c0_i32_0 = arith.constant 0 : i32
    %c0_i32_1 = arith.constant 0 : i32
    return %c0_i32, %c0_i32_0 : i32, i32
  }
  func.func @transform_6(%arg0: i32) -> (i32, i32) {
    %c0_i32 = arith.constant 0 : i32
    %c0_i32_0 = arith.constant 0 : i32
    %c0_i32_1 = arith.constant 0 : i32
    return %c0_i32, %c0_i32_0 : i32, i32
  }
  func.func @transform_7(%arg0: i32) -> (i32, i32) {
    %c0_i32 = arith.constant 0 : i32
    %c0_i32_0 = arith.constant 0 : i32
    %c0_i32_1 = arith.constant 0 : i32
    return %c0_i32, %c0_i32_0 : i32, i32
  }
  func.func @transform_8(%arg0: i32) -> (i32, i32) {
    %c0_i32 = arith.constant 0 : i32
    %c0_i32_0 = arith.constant 0 : i32
    %c0_i32_1 = arith.constant 0 : i32
    return %c0_i32, %c0_i32_0 : i32, i32
  }
  func.func @transform_9(%arg0: i32) -> (i32, i32) {
    %c0_i32 = arith.constant 0 : i32
    %c0_i32_0 = arith.constant 0 : i32
    %c0_i32_1 = arith.constant 0 : i32
    return %c0_i32, %c0_i32_0 : i32, i32
  }
  func.func @transform_10(%arg0: i32) -> (i32, i32) {
    %c0_i32 = arith.constant 0 : i32
    %c0_i32_0 = arith.constant 0 : i32
    %c0_i32_1 = arith.constant 0 : i32
    return %c0_i32, %c0_i32_0 : i32, i32
  }
  func.func @transform_11(%arg0: i32) -> (i32, i32) {
    %c0_i32 = arith.constant 0 : i32
    %c0_i32_0 = arith.constant 0 : i32
    %c0_i32_1 = arith.constant 0 : i32
    return %c0_i32, %c0_i32_0 : i32, i32
  }
  func.func @transform_12(%arg0: i32) -> (i32, i32) {
    %c0_i32 = arith.constant 0 : i32
    %c0_i32_0 = arith.constant 0 : i32
    %c0_i32_1 = arith.constant 0 : i32
    return %c0_i32, %c0_i32_0 : i32, i32
  }
  func.func @transform_13(%arg0: i32) -> (i32, i32) {
    %c0_i32 = arith.constant 0 : i32
    %c0_i32_0 = arith.constant 0 : i32
    %c0_i32_1 = arith.constant 0 : i32
    return %c0_i32, %c0_i32_0 : i32, i32
  }
  func.func @transform_14(%arg0: i32) -> (i32, i32) {
    %c0_i32 = arith.constant 0 : i32
    %c0_i32_0 = arith.constant 0 : i32
    %c0_i32_1 = arith.constant 0 : i32
    return %c0_i32, %c0_i32_0 : i32, i32
  }
  func.func @transform_15(%arg0: i32) -> (i32, i32, i32) {
    %c0_i32 = arith.constant 0 : i32
    %c0_i32_0 = arith.constant 0 : i32
    %c0_i32_1 = arith.constant 0 : i32
    return %arg0, %c0_i32, %c0_i32_0 : i32, i32, i32
  }
}

module attributes {stable_mosaic.version = 11 : i64} {
  func.func @encoder_layer_kernel(%arg0: i32, %arg1: memref<4x8x128xbf16, #tpu.memory_space<vmem>>, %arg2: memref<1x1x32xf32, #tpu.memory_space<vmem>>, %arg3: memref<32x32xf32, #tpu.memory_space<vmem>>, %arg4: memref<128x384xbf16, #tpu.memory_space<vmem>>, %arg5: memref<1x384xf32, #tpu.memory_space<vmem>>, %arg6: memref<128x128xbf16, #tpu.memory_space<vmem>>, %arg7: memref<1x128xf32, #tpu.memory_space<vmem>>, %arg8: memref<1x128xf32, #tpu.memory_space<vmem>>, %arg9: memref<1x128xf32, #tpu.memory_space<vmem>>, %arg10: memref<128x256xbf16, #tpu.memory_space<vmem>>, %arg11: memref<1x256xf32, #tpu.memory_space<vmem>>, %arg12: memref<256x128xbf16, #tpu.memory_space<vmem>>, %arg13: memref<1x128xf32, #tpu.memory_space<vmem>>, %arg14: memref<1x128xf32, #tpu.memory_space<vmem>>, %arg15: memref<1x128xf32, #tpu.memory_space<vmem>>, %arg16: memref<4x8x128xf32, #tpu.memory_space<vmem>>) attributes {dimension_semantics = [#tpu.dimension_semantics<parallel>], iteration_bounds = array<i64: 1>, scalar_prefetch = 0 : i64, scratch_operands = 0 : i64, tpu.core_type = #tpu.core_type<tc>, window_params = [{transform_indices = @transform_0, window_bounds = array<i64: 4, 8, 128>}, {transform_indices = @transform_1, window_bounds = array<i64: 1, 1, 32>}, {pipeline_mode = #tpu.pipeline_mode<synchronous>, transform_indices = @transform_2, window_bounds = array<i64: 32, 32>}, {pipeline_mode = #tpu.pipeline_mode<synchronous>, transform_indices = @transform_3, window_bounds = array<i64: 128, 384>}, {pipeline_mode = #tpu.pipeline_mode<synchronous>, transform_indices = @transform_4, window_bounds = array<i64: 1, 384>}, {pipeline_mode = #tpu.pipeline_mode<synchronous>, transform_indices = @transform_5, window_bounds = array<i64: 128, 128>}, {pipeline_mode = #tpu.pipeline_mode<synchronous>, transform_indices = @transform_6, window_bounds = array<i64: 1, 128>}, {pipeline_mode = #tpu.pipeline_mode<synchronous>, transform_indices = @transform_7, window_bounds = array<i64: 1, 128>}, {pipeline_mode = #tpu.pipeline_mode<synchronous>, transform_indices = @transform_8, window_bounds = array<i64: 1, 128>}, {pipeline_mode = #tpu.pipeline_mode<synchronous>, transform_indices = @transform_9, window_bounds = array<i64: 128, 256>}, {pipeline_mode = #tpu.pipeline_mode<synchronous>, transform_indices = @transform_10, window_bounds = array<i64: 1, 256>}, {pipeline_mode = #tpu.pipeline_mode<synchronous>, transform_indices = @transform_11, window_bounds = array<i64: 256, 128>}, {pipeline_mode = #tpu.pipeline_mode<synchronous>, transform_indices = @transform_12, window_bounds = array<i64: 1, 128>}, {pipeline_mode = #tpu.pipeline_mode<synchronous>, transform_indices = @transform_13, window_bounds = array<i64: 1, 128>}, {pipeline_mode = #tpu.pipeline_mode<synchronous>, transform_indices = @transform_14, window_bounds = array<i64: 1, 128>}, {transform_indices = @transform_15, window_bounds = array<i64: 4, 8, 128>}]} {
    %c0 = arith.constant 0 : index
    %c0_0 = arith.constant 0 : index
    %c0_1 = arith.constant 0 : index
    %0 = vector.load %arg1[%c0, %c0_0, %c0_1] : memref<4x8x128xbf16, #tpu.memory_space<vmem>>, vector<4x8x128xbf16>
    %1 = vector.shape_cast %0 : vector<4x8x128xbf16> to vector<32x128xbf16>
    %2 = arith.extf %1 : vector<32x128xbf16> to vector<32x128xf32>
    %c0_2 = arith.constant 0 : index
    %c0_3 = arith.constant 0 : index
    %3 = vector.load %arg4[%c0_2, %c0_3] : memref<128x384xbf16, #tpu.memory_space<vmem>>, vector<128x384xbf16>
    %cst = arith.constant dense<0.000000e+00> : vector<32x384xf32>
    %4 = tpu.matmul %1, %3, %cst {dimension_numbers = #tpu.dot_dimension_numbers<[1], [0], [0], [1], [0, 0, 1, 1], [], []>} : vector<32x128xbf16>, vector<128x384xbf16>, vector<32x384xf32> -> vector<32x384xf32>
    %c0_4 = arith.constant 0 : index
    %c0_5 = arith.constant 0 : index
    %5 = vector.load %arg5[%c0_4, %c0_5] : memref<1x384xf32, #tpu.memory_space<vmem>>, vector<1x384xf32>
    %6 = vector.broadcast %5 : vector<1x384xf32> to vector<32x384xf32>
    %7 = arith.addf %4, %6 : vector<32x384xf32>
    %8 = vector.extract_strided_slice %7 {offsets = [0, 0], sizes = [32, 128], strides = [1, 1]} : vector<32x384xf32> to vector<32x128xf32>
    %9 = arith.truncf %8 : vector<32x128xf32> to vector<32x128xbf16>
    %10 = vector.extract_strided_slice %7 {offsets = [0, 128], sizes = [32, 128], strides = [1, 1]} : vector<32x384xf32> to vector<32x128xf32>
    %11 = arith.truncf %10 : vector<32x128xf32> to vector<32x128xbf16>
    %12 = vector.extract_strided_slice %7 {offsets = [0, 256], sizes = [32, 128], strides = [1, 1]} : vector<32x384xf32> to vector<32x128xf32>
    %13 = arith.truncf %12 : vector<32x128xf32> to vector<32x128xbf16>
    %cst_6 = arith.constant dense<0.000000e+00> : vector<32x32xf32>
    %14 = tpu.matmul %9, %11, %cst_6 {dimension_numbers = #tpu.dot_dimension_numbers<[1], [1], [0], [0], [0, 0, 1, 0], [], []>} : vector<32x128xbf16>, vector<32x128xbf16>, vector<32x32xf32> -> vector<32x32xf32>
    %c0_7 = arith.constant 0 : index
    %c0_8 = arith.constant 0 : index
    %15 = vector.load %arg3[%c0_7, %c0_8] : memref<32x32xf32, #tpu.memory_space<vmem>>, vector<32x32xf32>
    %16 = arith.addf %14, %15 : vector<32x32xf32>
    %c0_9 = arith.constant 0 : index
    %c0_10 = arith.constant 0 : index
    %c0_11 = arith.constant 0 : index
    %17 = vector.load %arg2[%c0_9, %c0_10, %c0_11] : memref<1x1x32xf32, #tpu.memory_space<vmem>>, vector<1x1x32xf32>
    %18 = vector.shape_cast %17 : vector<1x1x32xf32> to vector<1x32xf32>
    %19 = vector.broadcast %18 : vector<1x32xf32> to vector<32x32xf32>
    %20 = arith.addf %16, %19 : vector<32x32xf32>
    %cst_12 = arith.constant dense<0xFF800000> : vector<32xf32>
    %21 = vector.multi_reduction <maximumf>, %20, %cst_12 [1] : vector<32x32xf32> to vector<32xf32>
    %22 = vector.shape_cast %21 : vector<32xf32> to vector<32x1xf32>
    %23 = vector.broadcast %22 : vector<32x1xf32> to vector<32x32xf32>
    %24 = arith.subf %20, %23 : vector<32x32xf32>
    %25 = math.exp %24 : vector<32x32xf32>
    %cst_13 = arith.constant dense<0.000000e+00> : vector<32xf32>
    %26 = vector.multi_reduction <add>, %25, %cst_13 [1] : vector<32x32xf32> to vector<32xf32>
    %27 = vector.shape_cast %26 : vector<32xf32> to vector<32x1xf32>
    %28 = arith.truncf %25 : vector<32x32xf32> to vector<32x32xbf16>
    %cst_14 = arith.constant dense<0.000000e+00> : vector<32x128xf32>
    %29 = tpu.matmul %28, %13, %cst_14 {dimension_numbers = #tpu.dot_dimension_numbers<[1], [0], [0], [1], [0, 0, 1, 1], [], []>} : vector<32x32xbf16>, vector<32x128xbf16>, vector<32x128xf32> -> vector<32x128xf32>
    %30 = tpu.reciprocal %27 {approx = true} : vector<32x1xf32> -> vector<32x1xf32>
    %31 = vector.broadcast %30 : vector<32x1xf32> to vector<32x128xf32>
    %32 = arith.mulf %29, %31 : vector<32x128xf32>
    %33 = arith.truncf %32 : vector<32x128xf32> to vector<32x128xbf16>
    %c0_15 = arith.constant 0 : index
    %c0_16 = arith.constant 0 : index
    %34 = vector.load %arg6[%c0_15, %c0_16] : memref<128x128xbf16, #tpu.memory_space<vmem>>, vector<128x128xbf16>
    %cst_17 = arith.constant dense<0.000000e+00> : vector<32x128xf32>
    %35 = tpu.matmul %33, %34, %cst_17 {dimension_numbers = #tpu.dot_dimension_numbers<[1], [0], [0], [1], [0, 0, 1, 1], [], []>} : vector<32x128xbf16>, vector<128x128xbf16>, vector<32x128xf32> -> vector<32x128xf32>
    %c0_18 = arith.constant 0 : index
    %c0_19 = arith.constant 0 : index
    %36 = vector.load %arg7[%c0_18, %c0_19] : memref<1x128xf32, #tpu.memory_space<vmem>>, vector<1x128xf32>
    %37 = vector.broadcast %36 : vector<1x128xf32> to vector<32x128xf32>
    %38 = arith.addf %35, %37 : vector<32x128xf32>
    %39 = arith.addf %2, %38 : vector<32x128xf32>
    %c0_20 = arith.constant 0 : index
    %c0_21 = arith.constant 0 : index
    %40 = vector.load %arg8[%c0_20, %c0_21] : memref<1x128xf32, #tpu.memory_space<vmem>>, vector<1x128xf32>
    %c0_22 = arith.constant 0 : index
    %c0_23 = arith.constant 0 : index
    %41 = vector.load %arg9[%c0_22, %c0_23] : memref<1x128xf32, #tpu.memory_space<vmem>>, vector<1x128xf32>
    %cst_24 = arith.constant dense<0.000000e+00> : vector<32xf32>
    %42 = vector.multi_reduction <add>, %39, %cst_24 [1] : vector<32x128xf32> to vector<32xf32>
    %43 = vector.shape_cast %42 : vector<32xf32> to vector<32x1xf32>
    %cst_25 = arith.constant 1.280000e+02 : f32
    %44 = vector.broadcast %cst_25 : f32 to vector<32x1xf32>
    %45 = arith.divf %43, %44 : vector<32x1xf32>
    %46 = vector.broadcast %45 : vector<32x1xf32> to vector<32x128xf32>
    %47 = arith.subf %39, %46 : vector<32x128xf32>
    %48 = arith.mulf %47, %47 : vector<32x128xf32>
    %cst_26 = arith.constant dense<0.000000e+00> : vector<32xf32>
    %49 = vector.multi_reduction <add>, %48, %cst_26 [1] : vector<32x128xf32> to vector<32xf32>
    %50 = vector.shape_cast %49 : vector<32xf32> to vector<32x1xf32>
    %cst_27 = arith.constant 1.280000e+02 : f32
    %51 = vector.broadcast %cst_27 : f32 to vector<32x1xf32>
    %52 = arith.divf %50, %51 : vector<32x1xf32>
    %cst_28 = arith.constant 9.99999974E-6 : f32
    %53 = vector.broadcast %cst_28 : f32 to vector<32x1xf32>
    %54 = arith.addf %52, %53 : vector<32x1xf32>
    %55 = math.rsqrt %54 : vector<32x1xf32>
    %56 = vector.broadcast %55 : vector<32x1xf32> to vector<32x128xf32>
    %57 = arith.mulf %47, %56 : vector<32x128xf32>
    %58 = vector.broadcast %40 : vector<1x128xf32> to vector<32x128xf32>
    %59 = arith.mulf %57, %58 : vector<32x128xf32>
    %60 = vector.broadcast %41 : vector<1x128xf32> to vector<32x128xf32>
    %61 = arith.addf %59, %60 : vector<32x128xf32>
    %62 = arith.truncf %61 : vector<32x128xf32> to vector<32x128xbf16>
    %c0_29 = arith.constant 0 : index
    %c0_30 = arith.constant 0 : index
    %63 = vector.load %arg10[%c0_29, %c0_30] : memref<128x256xbf16, #tpu.memory_space<vmem>>, vector<128x256xbf16>
    %cst_31 = arith.constant dense<0.000000e+00> : vector<32x256xf32>
    %64 = tpu.matmul %62, %63, %cst_31 {dimension_numbers = #tpu.dot_dimension_numbers<[1], [0], [0], [1], [0, 0, 1, 1], [], []>} : vector<32x128xbf16>, vector<128x256xbf16>, vector<32x256xf32> -> vector<32x256xf32>
    %c0_32 = arith.constant 0 : index
    %c0_33 = arith.constant 0 : index
    %65 = vector.load %arg11[%c0_32, %c0_33] : memref<1x256xf32, #tpu.memory_space<vmem>>, vector<1x256xf32>
    %66 = vector.broadcast %65 : vector<1x256xf32> to vector<32x256xf32>
    %67 = arith.addf %64, %66 : vector<32x256xf32>
    %cst_34 = arith.constant 0.000000e+00 : f32
    %68 = vector.broadcast %cst_34 : f32 to vector<32x256xf32>
    %69 = arith.maximumf %67, %68 : vector<32x256xf32>
    %70 = arith.truncf %69 : vector<32x256xf32> to vector<32x256xbf16>
    %c0_35 = arith.constant 0 : index
    %c0_36 = arith.constant 0 : index
    %71 = vector.load %arg12[%c0_35, %c0_36] : memref<256x128xbf16, #tpu.memory_space<vmem>>, vector<256x128xbf16>
    %cst_37 = arith.constant dense<0.000000e+00> : vector<32x128xf32>
    %72 = tpu.matmul %70, %71, %cst_37 {dimension_numbers = #tpu.dot_dimension_numbers<[1], [0], [0], [1], [0, 0, 1, 1], [], []>} : vector<32x256xbf16>, vector<256x128xbf16>, vector<32x128xf32> -> vector<32x128xf32>
    %c0_38 = arith.constant 0 : index
    %c0_39 = arith.constant 0 : index
    %73 = vector.load %arg13[%c0_38, %c0_39] : memref<1x128xf32, #tpu.memory_space<vmem>>, vector<1x128xf32>
    %74 = vector.broadcast %73 : vector<1x128xf32> to vector<32x128xf32>
    %75 = arith.addf %72, %74 : vector<32x128xf32>
    %76 = arith.addf %61, %75 : vector<32x128xf32>
    %c0_40 = arith.constant 0 : index
    %c0_41 = arith.constant 0 : index
    %77 = vector.load %arg14[%c0_40, %c0_41] : memref<1x128xf32, #tpu.memory_space<vmem>>, vector<1x128xf32>
    %c0_42 = arith.constant 0 : index
    %c0_43 = arith.constant 0 : index
    %78 = vector.load %arg15[%c0_42, %c0_43] : memref<1x128xf32, #tpu.memory_space<vmem>>, vector<1x128xf32>
    %cst_44 = arith.constant dense<0.000000e+00> : vector<32xf32>
    %79 = vector.multi_reduction <add>, %76, %cst_44 [1] : vector<32x128xf32> to vector<32xf32>
    %80 = vector.shape_cast %79 : vector<32xf32> to vector<32x1xf32>
    %cst_45 = arith.constant 1.280000e+02 : f32
    %81 = vector.broadcast %cst_45 : f32 to vector<32x1xf32>
    %82 = arith.divf %80, %81 : vector<32x1xf32>
    %83 = vector.broadcast %82 : vector<32x1xf32> to vector<32x128xf32>
    %84 = arith.subf %76, %83 : vector<32x128xf32>
    %85 = arith.mulf %84, %84 : vector<32x128xf32>
    %cst_46 = arith.constant dense<0.000000e+00> : vector<32xf32>
    %86 = vector.multi_reduction <add>, %85, %cst_46 [1] : vector<32x128xf32> to vector<32xf32>
    %87 = vector.shape_cast %86 : vector<32xf32> to vector<32x1xf32>
    %cst_47 = arith.constant 1.280000e+02 : f32
    %88 = vector.broadcast %cst_47 : f32 to vector<32x1xf32>
    %89 = arith.divf %87, %88 : vector<32x1xf32>
    %cst_48 = arith.constant 9.99999974E-6 : f32
    %90 = vector.broadcast %cst_48 : f32 to vector<32x1xf32>
    %91 = arith.addf %89, %90 : vector<32x1xf32>
    %92 = math.rsqrt %91 : vector<32x1xf32>
    %93 = vector.broadcast %92 : vector<32x1xf32> to vector<32x128xf32>
    %94 = arith.mulf %84, %93 : vector<32x128xf32>
    %95 = vector.broadcast %77 : vector<1x128xf32> to vector<32x128xf32>
    %96 = arith.mulf %94, %95 : vector<32x128xf32>
    %97 = vector.broadcast %78 : vector<1x128xf32> to vector<32x128xf32>
    %98 = arith.addf %96, %97 : vector<32x128xf32>
    %99 = vector.shape_cast %98 : vector<32x128xf32> to vector<4x8x128xf32>
    %c0_49 = arith.constant 0 : index
    %c0_50 = arith.constant 0 : index
    %c0_51 = arith.constant 0 : index
    %100 = vector.load %arg16[%c0_49, %c0_50, %c0_51] : memref<4x8x128xf32, #tpu.memory_space<vmem>>, vector<4x8x128xf32>
    tpu.vector_store %arg16[%c0_49, %c0_50, %c0_51], %99 {strides = array<i32>} : memref<4x8x128xf32, #tpu.memory_space<vmem>>, vector<4x8x128xf32>,
    return
  }
  func.func @transform_0(%arg0: i32) -> (i32, i32, i32) {
    %c0_i32 = arith.constant 0 : i32
    %c0_i32_0 = arith.constant 0 : i32
    %c0_i32_1 = arith.constant 0 : i32
    return %arg0, %c0_i32, %c0_i32_0 : i32, i32, i32
  }
  func.func @transform_1(%arg0: i32) -> (i32, i32, i32) {
    %c0_i32 = arith.constant 0 : i32
    %c0_i32_0 = arith.constant 0 : i32
    %c0_i32_1 = arith.constant 0 : i32
    return %arg0, %c0_i32, %c0_i32_0 : i32, i32, i32
  }
  func.func @transform_2(%arg0: i32) -> (i32, i32) {
    %c0_i32 = arith.constant 0 : i32
    %c0_i32_0 = arith.constant 0 : i32
    %c0_i32_1 = arith.constant 0 : i32
    return %c0_i32, %c0_i32_0 : i32, i32
  }
  func.func @transform_3(%arg0: i32) -> (i32, i32) {
    %c0_i32 = arith.constant 0 : i32
    %c0_i32_0 = arith.constant 0 : i32
    %c0_i32_1 = arith.constant 0 : i32
    return %c0_i32, %c0_i32_0 : i32, i32
  }
  func.func @transform_4(%arg0: i32) -> (i32, i32) {
    %c0_i32 = arith.constant 0 : i32
    %c0_i32_0 = arith.constant 0 : i32
    %c0_i32_1 = arith.constant 0 : i32
    return %c0_i32, %c0_i32_0 : i32, i32
  }
  func.func @transform_5(%arg0: i32) -> (i32, i32) {
    %c0_i32 = arith.constant 0 : i32
    %c0_i32_0 = arith.constant 0 : i32
    %c0_i32_1 = arith.constant 0 : i32
    return %c0_i32, %c0_i32_0 : i32, i32
  }
  func.func @transform_6(%arg0: i32) -> (i32, i32) {
    %c0_i32 = arith.constant 0 : i32
    %c0_i32_0 = arith.constant 0 : i32
    %c0_i32_1 = arith.constant 0 : i32
    return %c0_i32, %c0_i32_0 : i32, i32
  }
  func.func @transform_7(%arg0: i32) -> (i32, i32) {
    %c0_i32 = arith.constant 0 : i32
    %c0_i32_0 = arith.constant 0 : i32
    %c0_i32_1 = arith.constant 0 : i32
    return %c0_i32, %c0_i32_0 : i32, i32
  }
  func.func @transform_8(%arg0: i32) -> (i32, i32) {
    %c0_i32 = arith.constant 0 : i32
    %c0_i32_0 = arith.constant 0 : i32
    %c0_i32_1 = arith.constant 0 : i32
    return %c0_i32, %c0_i32_0 : i32, i32
  }
  func.func @transform_9(%arg0: i32) -> (i32, i32) {
    %c0_i32 = arith.constant 0 : i32
    %c0_i32_0 = arith.constant 0 : i32
    %c0_i32_1 = arith.constant 0 : i32
    return %c0_i32, %c0_i32_0 : i32, i32
  }
  func.func @transform_10(%arg0: i32) -> (i32, i32) {
    %c0_i32 = arith.constant 0 : i32
    %c0_i32_0 = arith.constant 0 : i32
    %c0_i32_1 = arith.constant 0 : i32
    return %c0_i32, %c0_i32_0 : i32, i32
  }
  func.func @transform_11(%arg0: i32) -> (i32, i32) {
    %c0_i32 = arith.constant 0 : i32
    %c0_i32_0 = arith.constant 0 : i32
    %c0_i32_1 = arith.constant 0 : i32
    return %c0_i32, %c0_i32_0 : i32, i32
  }
  func.func @transform_12(%arg0: i32) -> (i32, i32) {
    %c0_i32 = arith.constant 0 : i32
    %c0_i32_0 = arith.constant 0 : i32
    %c0_i32_1 = arith.constant 0 : i32
    return %c0_i32, %c0_i32_0 : i32, i32
  }
  func.func @transform_13(%arg0: i32) -> (i32, i32) {
    %c0_i32 = arith.constant 0 : i32
    %c0_i32_0 = arith.constant 0 : i32
    %c0_i32_1 = arith.constant 0 : i32
    return %c0_i32, %c0_i32_0 : i32, i32
  }
  func.func @transform_14(%arg0: i32) -> (i32, i32) {
    %c0_i32 = arith.constant 0 : i32
    %c0_i32_0 = arith.constant 0 : i32
    %c0_i32_1 = arith.constant 0 : i32
    return %c0_i32, %c0_i32_0 : i32, i32
  }
  func.func @transform_15(%arg0: i32) -> (i32, i32, i32) {
    %c0_i32 = arith.constant 0 : i32
    %c0_i32_0 = arith.constant 0 : i32
    %c0_i32_1 = arith.constant 0 : i32
    return %arg0, %c0_i32, %c0_i32_0 : i32, i32, i32
  }
}

</mosaic_0001>

<llo_original>
// kernel: tpu_custom_call.1
$region0: #{tpu_custom_call.1}
  #allocation0 [shape = 'u32[]', space=smem, size = 0x4, offset = 0x4, fixed_abs, tag = 'smem constant byte address 0x4 - core index']
  #allocation1 [shape = 'u32[72,128]{1,0:T(1,128)}', space=vmem, size = 0x9000, scoped, tag = 'internal scratch']
  %s0 = inlined_call_operand.hbm [shape: bf16[4,8,128], index: 0, kind: input, shape index: {}]
  %s1 = inlined_call_operand.hbm [shape: f32[1,1,32], index: 1, kind: input, shape index: {}]
  %s2 = inlined_call_operand.hbm [shape: f32[32,32], index: 2, kind: input, shape index: {}]
  %s3 = inlined_call_operand.hbm [shape: bf16[128,384], index: 3, kind: input, shape index: {}]
  %s4 = inlined_call_operand.vmem [shape: f32[1,384], index: 4, kind: input, shape index: {}]
  %s5 = inlined_call_operand.hbm [shape: bf16[128,128], index: 5, kind: input, shape index: {}]
  %s6 = inlined_call_operand.hbm [shape: f32[1,128], index: 6, kind: input, shape index: {}]
  %s7 = inlined_call_operand.vmem [shape: f32[1,128], index: 7, kind: input, shape index: {}]
  %s8 = inlined_call_operand.vmem [shape: f32[1,128], index: 8, kind: input, shape index: {}]
  %s9 = inlined_call_operand.hbm [shape: bf16[128,256], index: 9, kind: input, shape index: {}]
  %s10 = inlined_call_operand.vmem [shape: f32[1,256], index: 10, kind: input, shape index: {}]
  %s11 = inlined_call_operand.hbm [shape: bf16[256,128], index: 11, kind: input, shape index: {}]
  %s12 = inlined_call_operand.vmem [shape: f32[1,128], index: 12, kind: input, shape index: {}]
  %s13 = inlined_call_operand.vmem [shape: f32[1,128], index: 13, kind: input, shape index: {}]
  %s14 = inlined_call_operand.vmem [shape: f32[1,128], index: 14, kind: input, shape index: {}]
  %s15 = inlined_call_operand.hbm [shape: f32[4,8,128], index: 15, kind: output, shape index: {}]
  %s16 = sld [smem:[#allocation0]]
  $region102: #{tpu_custom_call.1} parent=0
    _
  %s18 = ssub.s32 1, %s16
  %s19 = scalar_select 0, %s18, %s16
  $region1: #{tpu_custom_call.1} parent=0
    #allocation2 [shape = 'u8[8192]{0}', space=vmem, size = 0x2000, scoped, tag = 'input window, operand 0, single buffered']
    #allocation3 [shape = 's32[1]{0}', space=sflag, size = 0x4, scoped, tag = 'scoped memory for tpu_custom_call.1']
    #allocation4 [shape = 's32[1]{0}', space=sflag, size = 0x4, scoped, tag = 'scoped memory for tpu_custom_call.1']
    #allocation5 [shape = 'u8[512]{0}', space=vmem, size = 0x400, scoped, tag = 'input window, operand 1, single buffered']
    #allocation6 [shape = 's32[1]{0}', space=sflag, size = 0x4, scoped, tag = 'scoped memory for tpu_custom_call.1']
    #allocation7 [shape = 'u8[16384]{0}', space=vmem, size = 0x4000, scoped, tag = 'input window, operand 2, single buffered']
    #allocation8 [shape = 'u8[98304]{0}', space=vmem, size = 0x18000, scoped, tag = 'input window, operand 3, single buffered']
    #allocation9 [shape = 's32[1]{0}', space=sflag, size = 0x4, scoped, tag = 'scoped memory for tpu_custom_call.1']
    #allocation10 [shape = 'u8[32768]{0}', space=vmem, size = 0x8000, scoped, tag = 'input window, operand 5, single buffered']
    #allocation11 [shape = 'u8[512]{0}', space=vmem, size = 0x400, scoped, tag = 'input window, operand 6, single buffered']
    #allocation12 [shape = 's32[1]{0}', space=sflag, size = 0x4, scoped, tag = 'scoped memory for tpu_custom_call.1']
    #allocation13 [shape = 'u8[65536]{0}', space=vmem, size = 0x10000, scoped, tag = 'input window, operand 9, single buffered']
    #allocation14 [shape = 'u8[65536]{0}', space=vmem, size = 0x10000, scoped, tag = 'input window, operand 11, single buffered']
    #allocation15 [shape = 's32[1]{0}', space=sflag, size = 0x4, scoped, tag = 'scoped memory for tpu_custom_call.1']
    #allocation16 [shape = 'u8[16384]{0}', space=vmem, size = 0x4000, scoped, tag = 'output window, operand 0, single buffered']
    %20 = vsyncpa [#allocation3], 0
    %21 = vsyncpa [#allocation6], 0
    %22 = vsyncpa [#allocation9], 0
    %23 = vsyncpa [#allocation12], 0
    %24 = vsyncpa [#allocation15], 0
    %25 = vsyncpa [#allocation4], 0
    // Predicated region
    $region2: #{tpu_custom_call.1} parent=1 // pred_check
      _
    $region3: #{tpu_custom_call.1} parent=1 // pred_check_branch
      %27 = sbr.rel (0) target = $region5
    $region4: #{tpu_custom_call.1} parent=1 // pred_region
      %29 = vsyncadd [#allocation3], 0
      %s30 = sshll.u32 %s0, 4
      %s31 = int_to_ptr.hbm [resolvable:$true] %s30
      %s32 = sshll.u32 [#allocation2], 4
      %s33 = int_to_ptr.vmem [resolvable:$true] %s32
      %38 = dma.hbm_to_vmem [thread:$0]  %s31, 256, %s33, [#allocation3], 64, 64, 4
    $region5: #{tpu_custom_call.1} parent=1 // pred_fallthru
      _
    // Predicated region
    $region6: #{tpu_custom_call.1} parent=1 // pred_check
      _
    $region7: #{tpu_custom_call.1} parent=1 // pred_check_branch
      %40 = sbr.rel (0) target = $region9
    $region8: #{tpu_custom_call.1} parent=1 // pred_region
      %42 = vsyncadd [#allocation6], 0
      %s44 = sshll.u32 %s1, 4
      %s45 = int_to_ptr.hbm [resolvable:$true] %s44
      %s46 = sshll.u32 [#allocation5], 4
      %s47 = int_to_ptr.vmem [resolvable:$true] %s46
      %49 = dma.hbm_to_vmem [thread:$0]  %s45, 16, %s47, [#allocation6]
    $region9: #{tpu_custom_call.1} parent=1 // pred_fallthru
      _
    // Predicated region
    $region10: #{tpu_custom_call.1} parent=1 // pred_check
      _
    $region11: #{tpu_custom_call.1} parent=1 // pred_check_branch
      %51 = sbr.rel (0) target = $region13
    $region12: #{tpu_custom_call.1} parent=1 // pred_region
      %53 = vsyncadd [#allocation6], 0
      %s54 = sshll.u32 %s2, 4
      %s55 = int_to_ptr.hbm [resolvable:$true] %s54
      %s56 = sshll.u32 [#allocation7], 4
      %s57 = int_to_ptr.vmem [resolvable:$true] %s56
      %62 = dma.hbm_to_vmem [thread:$0]  %s55, 512, %s57, [#allocation6], 128, 128, 8
    $region13: #{tpu_custom_call.1} parent=1 // pred_fallthru
      _
    // Predicated region
    $region14: #{tpu_custom_call.1} parent=1 // pred_check
      _
    $region15: #{tpu_custom_call.1} parent=1 // pred_check_branch
      %64 = sbr.rel (0) target = $region17
    $region16: #{tpu_custom_call.1} parent=1 // pred_region
      %66 = vsyncadd [#allocation9], 0
      %s67 = sshll.u32 %s3, 4
      %s68 = int_to_ptr.hbm [resolvable:$true] %s67
      %s69 = sshll.u32 [#allocation8], 4
      %s70 = int_to_ptr.vmem [resolvable:$true] %s69
      %75 = dma.hbm_to_vmem [thread:$0]  %s68, 3072, %s70, [#allocation9], 192, 192, 12
    $region17: #{tpu_custom_call.1} parent=1 // pred_fallthru
      _
    // Predicated region
    $region18: #{tpu_custom_call.1} parent=1 // pred_check
      _
    $region19: #{tpu_custom_call.1} parent=1 // pred_check_branch
      %77 = sbr.rel (0) target = $region21
    $region20: #{tpu_custom_call.1} parent=1 // pred_region
      _
    $region21: #{tpu_custom_call.1} parent=1 // pred_fallthru
      _
    // Predicated region
    $region22: #{tpu_custom_call.1} parent=1 // pred_check
      _
    $region23: #{tpu_custom_call.1} parent=1 // pred_check_branch
      %79 = sbr.rel (0) target = $region25
    $region24: #{tpu_custom_call.1} parent=1 // pred_region
      %81 = vsyncadd [#allocation9], 0
      %s82 = sshll.u32 %s5, 4
      %s83 = int_to_ptr.hbm [resolvable:$true] %s82
      %s84 = sshll.u32 [#allocation10], 4
      %s85 = int_to_ptr.vmem [resolvable:$true] %s84
      %90 = dma.hbm_to_vmem [thread:$0]  %s83, 1024, %s85, [#allocation9], 64, 64, 4
    $region25: #{tpu_custom_call.1} parent=1 // pred_fallthru
      _
    // Predicated region
    $region26: #{tpu_custom_call.1} parent=1 // pred_check
      _
    $region27: #{tpu_custom_call.1} parent=1 // pred_check_branch
      %92 = sbr.rel (0) target = $region29
    $region28: #{tpu_custom_call.1} parent=1 // pred_region
      %94 = vsyncadd [#allocation12], 0
      %s96 = sshll.u32 %s6, 4
      %s97 = int_to_ptr.hbm [resolvable:$true] %s96
      %s98 = sshll.u32 [#allocation11], 4
      %s99 = int_to_ptr.vmem [resolvable:$true] %s98
      %101 = dma.hbm_to_vmem [thread:$0]  %s97, 16, %s99, [#allocation12]
    $region29: #{tpu_custom_call.1} parent=1 // pred_fallthru
      _
    // Predicated region
    $region30: #{tpu_custom_call.1} parent=1 // pred_check
      _
    $region31: #{tpu_custom_call.1} parent=1 // pred_check_branch
      %103 = sbr.rel (0) target = $region33
    $region32: #{tpu_custom_call.1} parent=1 // pred_region
      _
    $region33: #{tpu_custom_call.1} parent=1 // pred_fallthru
      _
    // Predicated region
    $region34: #{tpu_custom_call.1} parent=1 // pred_check
      _
    $region35: #{tpu_custom_call.1} parent=1 // pred_check_branch
      %105 = sbr.rel (0) target = $region37
    $region36: #{tpu_custom_call.1} parent=1 // pred_region
      _
    $region37: #{tpu_custom_call.1} parent=1 // pred_fallthru
      _
    // Predicated region
    $region38: #{tpu_custom_call.1} parent=1 // pred_check
      _
    $region39: #{tpu_custom_call.1} parent=1 // pred_check_branch
      %107 = sbr.rel (0) target = $region41
    $region40: #{tpu_custom_call.1} parent=1 // pred_region
      %109 = vsyncadd [#allocation12], 0
      %s110 = sshll.u32 %s9, 4
      %s111 = int_to_ptr.hbm [resolvable:$true] %s110
      %s112 = sshll.u32 [#allocation13], 4
      %s113 = int_to_ptr.vmem [resolvable:$true] %s112
      %118 = dma.hbm_to_vmem [thread:$0]  %s111, 2048, %s113, [#allocation12], 128, 128, 8
    $region41: #{tpu_custom_call.1} parent=1 // pred_fallthru
      _
    // Predicated region
    $region42: #{tpu_custom_call.1} parent=1 // pred_check
      _
    $region43: #{tpu_custom_call.1} parent=1 // pred_check_branch
      %120 = sbr.rel (0) target = $region45
    $region44: #{tpu_custom_call.1} parent=1 // pred_region
      _
    $region45: #{tpu_custom_call.1} parent=1 // pred_fallthru
      _
    // Predicated region
    $region46: #{tpu_custom_call.1} parent=1 // pred_check
      _
    $region47: #{tpu_custom_call.1} parent=1 // pred_check_branch
      %122 = sbr.rel (0) target = $region49
    $region48: #{tpu_custom_call.1} parent=1 // pred_region
      %124 = vsyncadd [#allocation15], 0
      %s125 = sshll.u32 %s11, 4
      %s126 = int_to_ptr.hbm [resolvable:$true] %s125
      %s127 = sshll.u32 [#allocation14], 4
      %s128 = int_to_ptr.vmem [resolvable:$true] %s127
      %133 = dma.hbm_to_vmem [thread:$0]  %s126, 2048, %s128, [#allocation15], 64, 64, 4
    $region49: #{tpu_custom_call.1} parent=1 // pred_fallthru
      _
    // Predicated region
    $region50: #{tpu_custom_call.1} parent=1 // pred_check
      _
    $region51: #{tpu_custom_call.1} parent=1 // pred_check_branch
      %135 = sbr.rel (0) target = $region53
    $region52: #{tpu_custom_call.1} parent=1 // pred_region
      _
    $region53: #{tpu_custom_call.1} parent=1 // pred_fallthru
      _
    // Predicated region
    $region54: #{tpu_custom_call.1} parent=1 // pred_check
      _
    $region55: #{tpu_custom_call.1} parent=1 // pred_check_branch
      %137 = sbr.rel (0) target = $region57
    $region56: #{tpu_custom_call.1} parent=1 // pred_region
      _
    $region57: #{tpu_custom_call.1} parent=1 // pred_fallthru
      _
    // Predicated region
    $region58: #{tpu_custom_call.1} parent=1 // pred_check
      _
    $region59: #{tpu_custom_call.1} parent=1 // pred_check_branch
      %139 = sbr.rel (0) target = $region61
    $region60: #{tpu_custom_call.1} parent=1 // pred_region
      _
    $region61: #{tpu_custom_call.1} parent=1 // pred_fallthru
      _
    // Predicated region
    $region62: #{tpu_custom_call.1} parent=1 // pred_check
      _
    $region63: #{tpu_custom_call.1} parent=1 // pred_check_branch
      %141 = sbr.rel (0) target = $region65
    $region64: #{tpu_custom_call.1} parent=1 // pred_region
      %143 = dma.done [#allocation3], 256
    $region65: #{tpu_custom_call.1} parent=1 // pred_fallthru
      _
    // Predicated region
    $region66: #{tpu_custom_call.1} parent=1 // pred_check
      _
    $region67: #{tpu_custom_call.1} parent=1 // pred_check_branch
      %145 = sbr.rel (0) target = $region69
    $region68: #{tpu_custom_call.1} parent=1 // pred_region
      %147 = dma.done [#allocation6], 16
    $region69: #{tpu_custom_call.1} parent=1 // pred_fallthru
      _
    // Predicated region
    $region70: #{tpu_custom_call.1} parent=1 // pred_check
      _
    $region71: #{tpu_custom_call.1} parent=1 // pred_check_branch
      %149 = sbr.rel (0) target = $region73
    $region72: #{tpu_custom_call.1} parent=1 // pred_region
      %151 = dma.done [#allocation6], 512
    $region73: #{tpu_custom_call.1} parent=1 // pred_fallthru
      _
    // Predicated region
    $region74: #{tpu_custom_call.1} parent=1 // pred_check
      _
    $region75: #{tpu_custom_call.1} parent=1 // pred_check_branch
      %153 = sbr.rel (0) target = $region77
    $region76: #{tpu_custom_call.1} parent=1 // pred_region
      %155 = dma.done [#allocation9], 3072
    $region77: #{tpu_custom_call.1} parent=1 // pred_fallthru
      _
    // Predicated region
    $region78: #{tpu_custom_call.1} parent=1 // pred_check
      _
    $region79: #{tpu_custom_call.1} parent=1 // pred_check_branch
      %157 = sbr.rel (0) target = $region81
    $region80: #{tpu_custom_call.1} parent=1 // pred_region
      %159 = dma.done [#allocation9], 1024
    $region81: #{tpu_custom_call.1} parent=1 // pred_fallthru
      _
    // Predicated region
    $region82: #{tpu_custom_call.1} parent=1 // pred_check
      _
    $region83: #{tpu_custom_call.1} parent=1 // pred_check_branch
      %161 = sbr.rel (0) target = $region85
    $region84: #{tpu_custom_call.1} parent=1 // pred_region
      %163 = dma.done [#allocation12], 16
    $region85: #{tpu_custom_call.1} parent=1 // pred_fallthru
      _
    // Predicated region
    $region86: #{tpu_custom_call.1} parent=1 // pred_check
      _
    $region87: #{tpu_custom_call.1} parent=1 // pred_check_branch
      %165 = sbr.rel (0) target = $region89
    $region88: #{tpu_custom_call.1} parent=1 // pred_region
      %167 = dma.done [#allocation12], 2048
    $region89: #{tpu_custom_call.1} parent=1 // pred_fallthru
      _
    // Predicated region
    $region90: #{tpu_custom_call.1} parent=1 // pred_check
      _
    $region91: #{tpu_custom_call.1} parent=1 // pred_check_branch
      %169 = sbr.rel (0) target = $region93
    $region92: #{tpu_custom_call.1} parent=1 // pred_region
      %171 = dma.done [#allocation15], 2048
    $region93: #{tpu_custom_call.1} parent=1 // pred_fallthru
      _
    %v173 = vld [vmem:[#allocation2] sm:$0xf]
    %v174 = vld [vmem:[#allocation2 + $0x4] sm:$0xf]
    %v175 = vld [vmem:[#allocation2 + $0x8] sm:$0xf]
    %v176 = vld [vmem:[#allocation2 + $0xc] sm:$0xf]
    %v177 = vunpack.c.l.bf16 %v173
    %v178 = vunpack.c.l.bf16 %v174
    %v179 = vunpack.c.l.bf16 %v175
    %v180 = vunpack.c.l.bf16 %v176
    %v181 = vld [vmem:[#allocation8] sm:$0xff]
    %v182 = vld [vmem:[#allocation8 + $0x8] sm:$0xf]
    %v183 = vld [vmem:[#allocation8 + $0xc] sm:$0xff]
    %v184 = vld [vmem:[#allocation8 + $0x14] sm:$0xf]
    %v185 = vld [vmem:[#allocation8 + $0x18] sm:$0xff]
    %v186 = vld [vmem:[#allocation8 + $0x20] sm:$0xf]
    %v187 = vld [vmem:[#allocation8 + $0x24] sm:$0xff]
    %v188 = vld [vmem:[#allocation8 + $0x2c] sm:$0xf]
    %v189 = vld [vmem:[#allocation8 + $0x30] sm:$0xff]
    %v190 = vld [vmem:[#allocation8 + $0x38] sm:$0xf]
    %v191 = vld [vmem:[#allocation8 + $0x3c] sm:$0xff]
    %v192 = vld [vmem:[#allocation8 + $0x44] sm:$0xf]
    %v193 = vld [vmem:[#allocation8 + $0x48] sm:$0xff]
    %v194 = vld [vmem:[#allocation8 + $0x50] sm:$0xf]
    %v195 = vld [vmem:[#allocation8 + $0x54] sm:$0xff]
    %v196 = vld [vmem:[#allocation8 + $0x5c] sm:$0xf]
    %v197 = vld [vmem:[#allocation8 + $0x60] sm:$0xff]
    %v198 = vld [vmem:[#allocation8 + $0x68] sm:$0xf]
    %v199 = vld [vmem:[#allocation8 + $0x6c] sm:$0xff]
    %v200 = vld [vmem:[#allocation8 + $0x74] sm:$0xf]
    %v201 = vld [vmem:[#allocation8 + $0x78] sm:$0xff]
    %v202 = vld [vmem:[#allocation8 + $0x80] sm:$0xf]
    %v203 = vld [vmem:[#allocation8 + $0x84] sm:$0xff]
    %v204 = vld [vmem:[#allocation8 + $0x8c] sm:$0xf]
    %v205 = vld [vmem:[#allocation8 + $0x90] sm:$0xff]
    %v206 = vld [vmem:[#allocation8 + $0x98] sm:$0xf]
    %v207 = vld [vmem:[#allocation8 + $0x9c] sm:$0xff]
    %v208 = vld [vmem:[#allocation8 + $0xa4] sm:$0xf]
    %v209 = vld [vmem:[#allocation8 + $0xa8] sm:$0xff]
    %v210 = vld [vmem:[#allocation8 + $0xb0] sm:$0xf]
    %v211 = vld [vmem:[#allocation8 + $0xb4] sm:$0xff]
    %v212 = vld [vmem:[#allocation8 + $0xbc] sm:$0xf]
    %v213 = vld [vmem:[%s4] sm:$0x7]
    %v215 = vperm.slane %v213, 0
    %v216 = vperm.slane %v213, 1
    %v217 = vperm.slane %v213, 2
    %v225 = vunpack.c.l.b16 %v173
    %v226 = vunpack.c.l.b16 %v174
    %v227 = vunpack.c.l.b16 %v175
    %v228 = vunpack.c.l.b16 %v176
    %v229 = vpack.c.b16 %v226, %v225
    %v230 = vpack.c.b16 %v228, %v227
    %v265 = vunpack.c.l.b16 %v181
    %v266 = vunpack.c.h.b16 %v181
    %v267 = vunpack.c.l.b16 %v182
    %v268 = vunpack.c.l.b16 %v183
    %v269 = vunpack.c.h.b16 %v183
    %v270 = vunpack.c.l.b16 %v184
    %v271 = vunpack.c.l.b16 %v185
    %v272 = vunpack.c.h.b16 %v185
    %v273 = vunpack.c.l.b16 %v186
    %v274 = vunpack.c.l.b16 %v187
    %v275 = vunpack.c.h.b16 %v187
    %v276 = vunpack.c.l.b16 %v188
    %v277 = vunpack.c.l.b16 %v189
    %v278 = vunpack.c.h.b16 %v189
    %v279 = vunpack.c.l.b16 %v190
    %v280 = vunpack.c.l.b16 %v191
    %v281 = vunpack.c.h.b16 %v191
    %v282 = vunpack.c.l.b16 %v192
    %v283 = vunpack.c.l.b16 %v193
    %v284 = vunpack.c.h.b16 %v193
    %v285 = vunpack.c.l.b16 %v194
    %v286 = vunpack.c.l.b16 %v195
    %v287 = vunpack.c.h.b16 %v195
    %v288 = vunpack.c.l.b16 %v196
    %v289 = vunpack.c.l.b16 %v197
    %v290 = vunpack.c.h.b16 %v197
    %v291 = vunpack.c.l.b16 %v198
    %v292 = vunpack.c.l.b16 %v199
    %v293 = vunpack.c.h.b16 %v199
    %v294 = vunpack.c.l.b16 %v200
    %v295 = vunpack.c.l.b16 %v201
    %v296 = vunpack.c.h.b16 %v201
    %v297 = vunpack.c.l.b16 %v202
    %v298 = vunpack.c.l.b16 %v203
    %v299 = vunpack.c.h.b16 %v203
    %v300 = vunpack.c.l.b16 %v204
    %v301 = vunpack.c.l.b16 %v205
    %v302 = vunpack.c.h.b16 %v205
    %v303 = vunpack.c.l.b16 %v206
    %v304 = vunpack.c.l.b16 %v207
    %v305 = vunpack.c.h.b16 %v207
    %v306 = vunpack.c.l.b16 %v208
    %v307 = vunpack.c.l.b16 %v209
    %v308 = vunpack.c.h.b16 %v209
    %v309 = vunpack.c.l.b16 %v210
    %v310 = vunpack.c.l.b16 %v211
    %v311 = vunpack.c.h.b16 %v211
    %v312 = vunpack.c.l.b16 %v212
    %v313 = vpack.c.b16 %v268, %v265
    %v314 = vpack.c.b16 %v269, %v266
    %v315 = vpack.c.b16 %v270, %v267
    %v316 = vpack.c.b16 %v274, %v271
    %v317 = vpack.c.b16 %v275, %v272
    %v318 = vpack.c.b16 %v276, %v273
    %v319 = vpack.c.b16 %v280, %v277
    %v320 = vpack.c.b16 %v281, %v278
    %v321 = vpack.c.b16 %v282, %v279
    %v322 = vpack.c.b16 %v286, %v283
    %v323 = vpack.c.b16 %v287, %v284
    %v324 = vpack.c.b16 %v288, %v285
    %v325 = vpack.c.b16 %v292, %v289
    %v326 = vpack.c.b16 %v293, %v290
    %v327 = vpack.c.b16 %v294, %v291
    %v328 = vpack.c.b16 %v298, %v295
    %v329 = vpack.c.b16 %v299, %v296
    %v330 = vpack.c.b16 %v300, %v297
    %v331 = vpack.c.b16 %v304, %v301
    %v332 = vpack.c.b16 %v305, %v302
    %v333 = vpack.c.b16 %v306, %v303
    %v334 = vpack.c.b16 %v310, %v307
    %v335 = vpack.c.b16 %v311, %v308
    %v336 = vpack.c.b16 %v312, %v309
    %361 = vmatpush.bf16.msra.mxu0 %v334
    %362 = vmatpush.bf16.msra.mxu0 %v331
    %363 = vmatpush.bf16.msra.mxu0 %v328
    %364 = vmatpush.bf16.msra.mxu0 %v325
    %365 = vmatpush.bf16.msra.mxu0 %v322
    %366 = vmatpush.bf16.msra.mxu0 %v319
    %367 = vmatpush.bf16.msra.mxu0 %v316
    %368 = vmatpush.bf16.msra.mxu0 %v313
    %369 = vmatmul.bf16.gmra.mxu0 %v229
    %v370 = vpop.f32.mrf.mxu0
    %v371 = vadd.f32 %v215, %v370
    %v372 = vpop.f32.mrf.mxu0
    %v373 = vadd.f32 %v215, %v372
    %374 = vmatmul.bf16.gmra.mxu0 %v230
    %v375 = vpop.f32.mrf.mxu0
    %v376 = vadd.f32 %v215, %v375
    %v377 = vpop.f32.mrf.mxu0
    %v378 = vadd.f32 %v215, %v377
    %379 = vdwg.mxu0
    %380 = vmatpush.bf16.msra.mxu0 %v335
    %381 = vmatpush.bf16.msra.mxu0 %v332
    %382 = vmatpush.bf16.msra.mxu0 %v329
    %383 = vmatpush.bf16.msra.mxu0 %v326
    %384 = vmatpush.bf16.msra.mxu0 %v323
    %385 = vmatpush.bf16.msra.mxu0 %v320
    %386 = vmatpush.bf16.msra.mxu0 %v317
    %387 = vmatpush.bf16.msra.mxu0 %v314
    %388 = vmatmul.bf16.gmra.mxu0 %v229
    %v389 = vpop.f32.mrf.mxu0
    %v390 = vadd.f32 %v216, %v389
    %v391 = vpop.f32.mrf.mxu0
    %v392 = vadd.f32 %v216, %v391
    %393 = vmatmul.bf16.gmra.mxu0 %v230
    %v394 = vpop.f32.mrf.mxu0
    %v395 = vadd.f32 %v216, %v394
    %v396 = vpop.f32.mrf.mxu0
    %v397 = vadd.f32 %v216, %v396
    %398 = vdwg.mxu0
    %399 = vmatpush.bf16.msra.mxu0 %v336
    %400 = vmatpush.bf16.msra.mxu0 %v333
    %401 = vmatpush.bf16.msra.mxu0 %v330
    %402 = vmatpush.bf16.msra.mxu0 %v327
    %403 = vmatpush.bf16.msra.mxu0 %v324
    %404 = vmatpush.bf16.msra.mxu0 %v321
    %405 = vmatpush.bf16.msra.mxu0 %v318
    %406 = vmatpush.bf16.msra.mxu0 %v315
    %407 = vmatmul.bf16.gmra.mxu0 %v229
    %v408 = vpop.f32.mrf.mxu0
    %v409 = vadd.f32 %v217, %v408
    %v410 = vpop.f32.mrf.mxu0
    %v411 = vadd.f32 %v217, %v410
    %412 = vmatmul.bf16.gmra.mxu0 %v230
    %v413 = vpop.f32.mrf.mxu0
    %v414 = vadd.f32 %v217, %v413
    %v415 = vpop.f32.mrf.mxu0
    %v416 = vadd.f32 %v217, %v415
    %417 = vdwg.mxu0
    %v418 = vpack.c.bf16 %v373, %v371
    %v419 = vpack.c.bf16 %v378, %v376
    %v420 = vpack.c.bf16 %v392, %v390
    %v421 = vpack.c.bf16 %v397, %v395
    %v422 = vpack.c.bf16 %v411, %v409
    %v423 = vpack.c.bf16 %v416, %v414
    %v424 = vld [vmem:[#allocation7] sm:$0xff]
    %v425 = vld [vmem:[#allocation7 + $0x8] sm:$0xff]
    %v426 = vld [vmem:[#allocation7 + $0x10] sm:$0xff]
    %v427 = vld [vmem:[#allocation7 + $0x18] sm:$0xff]
    %428 = vmatpush.bf16.xpose.msra.mxu0 0
    %429 = vmatpush.bf16.xpose.msra.mxu0 0
    %430 = vmatpush.bf16.xpose.msra.mxu0 0
    %431 = vmatpush.bf16.xpose.msra.mxu0 0
    %432 = vmatpush.bf16.xpose.msra.mxu0 0
    %433 = vmatpush.bf16.xpose.msra.mxu0 0
    %434 = vmatpush.bf16.xpose.msra.mxu0 %v421
    %435 = vmatpush.bf16.xpose.msra.mxu0 %v420
    %436 = vmatmul.bf16.gmra.mxu0 %v418
    %v437 = vpop.f32.mrf.mxu0
    %v438 = vadd.f32 %v424, %v437
    %v439 = vpop.f32.mrf.mxu0
    %v440 = vadd.f32 %v425, %v439
    %441 = vmatmul.bf16.gmra.mxu0 %v419
    %v442 = vpop.f32.mrf.mxu0
    %v443 = vadd.f32 %v426, %v442
    %v444 = vpop.f32.mrf.mxu0
    %v445 = vadd.f32 %v427, %v444
    %446 = vdwg.mxu0
    %v447 = vld [vmem:[#allocation5] sm:$0x1]
    %v449 = vperm.slane %v447, 0
    %v451 = vadd.f32 %v438, %v449
    %v452 = vadd.f32 %v440, %v449
    %v453 = vadd.f32 %v443, %v449
    %v454 = vadd.f32 %v445, %v449
    %vm455 = vcmask 261120
    %v456 = vsel %vm455, %v451, -inf
    %457 = vmax.xlane.f32.xlu0 %v456
    %v458 = vpop.xlane.xlu0 %457
    %v459 = vsel %vm455, %v452, -inf
    %460 = vmax.xlane.f32.xlu0 %v459
    %v461 = vpop.xlane.xlu0 %460
    %v462 = vsel %vm455, %v453, -inf
    %463 = vmax.xlane.f32.xlu0 %v462
    %v464 = vpop.xlane.xlu0 %463
    %v465 = vsel %vm455, %v454, -inf
    %466 = vmax.xlane.f32.xlu0 %v465
    %v467 = vpop.xlane.xlu0 %466
    %v468 = vsub.f32 %v451, %v458
    %v469 = vsub.f32 %v452, %v461
    %v470 = vsub.f32 %v453, %v464
    %v471 = vsub.f32 %v454, %v467
    %v472 = vmul.f32 %v468, 1.442695
    %v473 = vpow.pop %v472
    %v474 = vmul.f32 %v469, 1.442695
    %v475 = vpow.pop %v474
    %v476 = vmul.f32 %v470, 1.442695
    %v477 = vpow.pop %v476
    %v478 = vmul.f32 %v471, 1.442695
    %v479 = vpow.pop %v478
    %v480 = vsel %vm455, %v473, 0.0
    %481 = vadd.xlane.f32.xlu0 %v480
    %v482 = vpop.xlane.xlu0 %481
    %v483 = vsel %vm455, %v475, 0.0
    %484 = vadd.xlane.f32.xlu0 %v483
    %v485 = vpop.xlane.xlu0 %484
    %v486 = vsel %vm455, %v477, 0.0
    %487 = vadd.xlane.f32.xlu0 %v486
    %v488 = vpop.xlane.xlu0 %487
    %v489 = vsel %vm455, %v479, 0.0
    %490 = vadd.xlane.f32.xlu0 %v489
    %v491 = vpop.xlane.xlu0 %490
    %v492 = vpack.c.bf16 %v475, %v473
    %v493 = vpack.c.bf16 %v479, %v477
    %v495 = vsel %vm455, %v492, 0
    %v498 = vsel %vm455, %v493, 0
    %500 = vmatpush.bf16.msra.mxu0 0
    %501 = vmatpush.bf16.msra.mxu0 0
    %502 = vmatpush.bf16.msra.mxu0 0
    %503 = vmatpush.bf16.msra.mxu0 0
    %504 = vmatpush.bf16.msra.mxu0 0
    %505 = vmatpush.bf16.msra.mxu0 0
    %506 = vmatpush.bf16.msra.mxu0 %v423
    %507 = vmatpush.bf16.msra.mxu0 %v422
    %508 = vmatmul.bf16.gmra.mxu0 %v495
    %v509 = vpop.f32.mrf.mxu0
    %v510 = vadd.f32 0.0, %v509
    %v511 = vpop.f32.mrf.mxu0
    %v512 = vadd.f32 0.0, %v511
    %513 = vmatmul.bf16.gmra.mxu0 %v498
    %v514 = vpop.f32.mrf.mxu0
    %v515 = vadd.f32 0.0, %v514
    %v516 = vpop.f32.mrf.mxu0
    %v517 = vadd.f32 0.0, %v516
    %518 = vdwg.mxu0
    %v519 = vrcp.pop %v482
    %v520 = vrcp.pop %v485
    %v521 = vrcp.pop %v488
    %v522 = vrcp.pop %v491
    %v523 = vmul.f32 %v510, %v519
    %v524 = vmul.f32 %v512, %v520
    %v525 = vmul.f32 %v515, %v521
    %v526 = vmul.f32 %v517, %v522
    %v527 = vpack.c.bf16 %v524, %v523
    %v528 = vpack.c.bf16 %v526, %v525
    %v529 = vld [vmem:[#allocation10] sm:$0xf]
    %v530 = vld [vmem:[#allocation10 + $0x4] sm:$0xf]
    %v531 = vld [vmem:[#allocation10 + $0x8] sm:$0xf]
    %v532 = vld [vmem:[#allocation10 + $0xc] sm:$0xf]
    %v533 = vld [vmem:[#allocation10 + $0x10] sm:$0xf]
    %v534 = vld [vmem:[#allocation10 + $0x14] sm:$0xf]
    %v535 = vld [vmem:[#allocation10 + $0x18] sm:$0xf]
    %v536 = vld [vmem:[#allocation10 + $0x1c] sm:$0xf]
    %v537 = vld [vmem:[#allocation10 + $0x20] sm:$0xf]
    %v538 = vld [vmem:[#allocation10 + $0x24] sm:$0xf]
    %v539 = vld [vmem:[#allocation10 + $0x28] sm:$0xf]
    %v540 = vld [vmem:[#allocation10 + $0x2c] sm:$0xf]
    %v541 = vld [vmem:[#allocation10 + $0x30] sm:$0xf]
    %v542 = vld [vmem:[#allocation10 + $0x34] sm:$0xf]
    %v543 = vld [vmem:[#allocation10 + $0x38] sm:$0xf]
    %v544 = vld [vmem:[#allocation10 + $0x3c] sm:$0xf]
    %v545 = vld [vmem:[#allocation11] sm:$0x1]
    %v547 = vperm.slane %v545, 0
    %v565 = vunpack.c.l.b16 %v529
    %v566 = vunpack.c.l.b16 %v530
    %v567 = vunpack.c.l.b16 %v531
    %v568 = vunpack.c.l.b16 %v532
    %v569 = vunpack.c.l.b16 %v533
    %v570 = vunpack.c.l.b16 %v534
    %v571 = vunpack.c.l.b16 %v535
    %v572 = vunpack.c.l.b16 %v536
    %v573 = vunpack.c.l.b16 %v537
    %v574 = vunpack.c.l.b16 %v538
    %v575 = vunpack.c.l.b16 %v539
    %v576 = vunpack.c.l.b16 %v540
    %v577 = vunpack.c.l.b16 %v541
    %v578 = vunpack.c.l.b16 %v542
    %v579 = vunpack.c.l.b16 %v543
    %v580 = vunpack.c.l.b16 %v544
    %v581 = vpack.c.b16 %v566, %v565
    %v582 = vpack.c.b16 %v568, %v567
    %v583 = vpack.c.b16 %v570, %v569
    %v584 = vpack.c.b16 %v572, %v571
    %v585 = vpack.c.b16 %v574, %v573
    %v586 = vpack.c.b16 %v576, %v575
    %v587 = vpack.c.b16 %v578, %v577
    %v588 = vpack.c.b16 %v580, %v579
    %597 = vmatpush.bf16.msra.mxu0 %v588
    %598 = vmatpush.bf16.msra.mxu0 %v587
    %599 = vmatpush.bf16.msra.mxu0 %v586
    %600 = vmatpush.bf16.msra.mxu0 %v585
    %601 = vmatpush.bf16.msra.mxu0 %v584
    %602 = vmatpush.bf16.msra.mxu0 %v583
    %603 = vmatpush.bf16.msra.mxu0 %v582
    %604 = vmatpush.bf16.msra.mxu0 %v581
    %605 = vmatmul.bf16.gmra.mxu0 %v527
    %v606 = vpop.f32.mrf.mxu0
    %v607 = vadd.f32 %v547, %v606
    %v608 = vpop.f32.mrf.mxu0
    %v609 = vadd.f32 %v547, %v608
    %610 = vmatmul.bf16.gmra.mxu0 %v528
    %v611 = vpop.f32.mrf.mxu0
    %v612 = vadd.f32 %v547, %v611
    %v613 = vpop.f32.mrf.mxu0
    %v614 = vadd.f32 %v547, %v613
    %615 = vdwg.mxu0
    %v616 = vadd.f32 %v177, %v607
    %v617 = vadd.f32 %v178, %v609
    %v618 = vadd.f32 %v179, %v612
    %v619 = vadd.f32 %v180, %v614
    %v620 = vld [vmem:[%s7] sm:$0x1]
    %v621 = vld [vmem:[%s8] sm:$0x1]
    %622 = vadd.xlane.f32.xlu0 %v616
    %v623 = vpop.xlane.xlu0 %622
    %624 = vadd.xlane.f32.xlu0 %v617
    %v625 = vpop.xlane.xlu0 %624
    %626 = vadd.xlane.f32.xlu0 %v618
    %v627 = vpop.xlane.xlu0 %626
    %628 = vadd.xlane.f32.xlu0 %v619
    %v629 = vpop.xlane.xlu0 %628
    %v630 = vrcp.pop 128.0
    %v631 = vmul.f32 128.0, %v630
    %v632 = vsub.f32 1.0, %v631
    %v633 = vmul.f32 %v630, %v632
    %v634 = vadd.f32 %v630, %v633
    %vm635 = vweird.f32 %v630
    %v636 = vsel %vm635, %v630, %v634
    %v637 = vmul.f32 %v623, %v636
    %v638 = vmul.f32 %v625, %v636
    %v639 = vmul.f32 %v627, %v636
    %v640 = vmul.f32 %v629, %v636
    %v641 = vsub.f32 %v616, %v637
    %v642 = vsub.f32 %v617, %v638
    %v643 = vsub.f32 %v618, %v639
    %v644 = vsub.f32 %v619, %v640
    %v645 = vmul.f32 %v641, %v641
    %v646 = vmul.f32 %v642, %v642
    %v647 = vmul.f32 %v643, %v643
    %v648 = vmul.f32 %v644, %v644
    %649 = vadd.xlane.f32.xlu0 %v645
    %v650 = vpop.xlane.xlu0 %649
    %651 = vadd.xlane.f32.xlu0 %v646
    %v652 = vpop.xlane.xlu0 %651
    %653 = vadd.xlane.f32.xlu0 %v647
    %v654 = vpop.xlane.xlu0 %653
    %655 = vadd.xlane.f32.xlu0 %v648
    %v656 = vpop.xlane.xlu0 %655
    %v657 = vmul.f32 %v650, %v636
    %v658 = vmul.f32 %v652, %v636
    %v659 = vmul.f32 %v654, %v636
    %v660 = vmul.f32 %v656, %v636
    %v661 = vadd.f32 %v657, 1e-05
    %v662 = vadd.f32 %v658, 1e-05
    %v663 = vadd.f32 %v659, 1e-05
    %v664 = vadd.f32 %v660, 1e-05
    %v665 = vrsqrt.pop %v661
    %v666 = vmul.f32 %v665, %v661
    %v667 = vmul.f32 %v666, %v665
    %v668 = vmul.f32 0.5, %v667
    %v669 = vsub.f32 1.5, %v668
    %v670 = vmul.f32 %v665, %v669
    %vm671 = vweird.f32 %v661
    %vm672 = vweird.f32 %v665
    %vm673 = vmor %vm671, %vm672
    %v674 = vsel %vm673, %v665, %v670
    %v675 = vrsqrt.pop %v662
    %v676 = vmul.f32 %v675, %v662
    %v677 = vmul.f32 %v676, %v675
    %v678 = vmul.f32 0.5, %v677
    %v679 = vsub.f32 1.5, %v678
    %v680 = vmul.f32 %v675, %v679
    %vm681 = vweird.f32 %v662
    %vm682 = vweird.f32 %v675
    %vm683 = vmor %vm681, %vm682
    %v684 = vsel %vm683, %v675, %v680
    %v685 = vrsqrt.pop %v663
    %v686 = vmul.f32 %v685, %v663
    %v687 = vmul.f32 %v686, %v685
    %v688 = vmul.f32 0.5, %v687
    %v689 = vsub.f32 1.5, %v688
    %v690 = vmul.f32 %v685, %v689
    %vm691 = vweird.f32 %v663
    %vm692 = vweird.f32 %v685
    %vm693 = vmor %vm691, %vm692
    %v694 = vsel %vm693, %v685, %v690
    %v695 = vrsqrt.pop %v664
    %v696 = vmul.f32 %v695, %v664
    %v697 = vmul.f32 %v696, %v695
    %v698 = vmul.f32 0.5, %v697
    %v699 = vsub.f32 1.5, %v698
    %v700 = vmul.f32 %v695, %v699
    %vm701 = vweird.f32 %v664
    %vm702 = vweird.f32 %v695
    %vm703 = vmor %vm701, %vm702
    %v704 = vsel %vm703, %v695, %v700
    %v705 = vmul.f32 %v641, %v674
    %v706 = vmul.f32 %v642, %v684
    %v707 = vmul.f32 %v643, %v694
    %v708 = vmul.f32 %v644, %v704
    %v710 = vperm.slane %v620, 0
    %v712 = vmul.f32 %v705, %v710
    %v713 = vmul.f32 %v706, %v710
    %v714 = vmul.f32 %v707, %v710
    %v715 = vmul.f32 %v708, %v710
    %v717 = vperm.slane %v621, 0
    %v719 = vadd.f32 %v712, %v717
    %v720 = vadd.f32 %v713, %v717
    %v721 = vadd.f32 %v714, %v717
    %v722 = vadd.f32 %v715, %v717
    %v723 = vpack.c.bf16 %v720, %v719
    %v724 = vpack.c.bf16 %v722, %v721
    %v725 = vld [vmem:[#allocation13] sm:$0xff]
    %v726 = vld [vmem:[#allocation13 + $0x8] sm:$0xff]
    %v727 = vld [vmem:[#allocation13 + $0x10] sm:$0xff]
    %v728 = vld [vmem:[#allocation13 + $0x18] sm:$0xff]
    %v729 = vld [vmem:[#allocation13 + $0x20] sm:$0xff]
    %v730 = vld [vmem:[#allocation13 + $0x28] sm:$0xff]
    %v731 = vld [vmem:[#allocation13 + $0x30] sm:$0xff]
    %v732 = vld [vmem:[#allocation13 + $0x38] sm:$0xff]
    %v733 = vld [vmem:[#allocation13 + $0x40] sm:$0xff]
    %v734 = vld [vmem:[#allocation13 + $0x48] sm:$0xff]
    %v735 = vld [vmem:[#allocation13 + $0x50] sm:$0xff]
    %v736 = vld [vmem:[#allocation13 + $0x58] sm:$0xff]
    %v737 = vld [vmem:[#allocation13 + $0x60] sm:$0xff]
    %v738 = vld [vmem:[#allocation13 + $0x68] sm:$0xff]
    %v739 = vld [vmem:[#allocation13 + $0x70] sm:$0xff]
    %v740 = vld [vmem:[#allocation13 + $0x78] sm:$0xff]
    %v741 = vld [vmem:[%s10] sm:$0x3]
    %v743 = vperm.slane %v741, 0
    %v744 = vperm.slane %v741, 1
    %v763 = vunpack.c.l.b16 %v725
    %v764 = vunpack.c.h.b16 %v725
    %v765 = vunpack.c.l.b16 %v726
    %v766 = vunpack.c.h.b16 %v726
    %v767 = vunpack.c.l.b16 %v727
    %v768 = vunpack.c.h.b16 %v727
    %v769 = vunpack.c.l.b16 %v728
    %v770 = vunpack.c.h.b16 %v728
    %v771 = vunpack.c.l.b16 %v729
    %v772 = vunpack.c.h.b16 %v729
    %v773 = vunpack.c.l.b16 %v730
    %v774 = vunpack.c.h.b16 %v730
    %v775 = vunpack.c.l.b16 %v731
    %v776 = vunpack.c.h.b16 %v731
    %v777 = vunpack.c.l.b16 %v732
    %v778 = vunpack.c.h.b16 %v732
    %v779 = vunpack.c.l.b16 %v733
    %v780 = vunpack.c.h.b16 %v733
    %v781 = vunpack.c.l.b16 %v734
    %v782 = vunpack.c.h.b16 %v734
    %v783 = vunpack.c.l.b16 %v735
    %v784 = vunpack.c.h.b16 %v735
    %v785 = vunpack.c.l.b16 %v736
    %v786 = vunpack.c.h.b16 %v736
    %v787 = vunpack.c.l.b16 %v737
    %v788 = vunpack.c.h.b16 %v737
    %v789 = vunpack.c.l.b16 %v738
    %v790 = vunpack.c.h.b16 %v738
    %v791 = vunpack.c.l.b16 %v739
    %v792 = vunpack.c.h.b16 %v739
    %v793 = vunpack.c.l.b16 %v740
    %v794 = vunpack.c.h.b16 %v740
    %v795 = vpack.c.b16 %v765, %v763
    %v796 = vpack.c.b16 %v766, %v764
    %v797 = vpack.c.b16 %v769, %v767
    %v798 = vpack.c.b16 %v770, %v768
    %v799 = vpack.c.b16 %v773, %v771
    %v800 = vpack.c.b16 %v774, %v772
    %v801 = vpack.c.b16 %v777, %v775
    %v802 = vpack.c.b16 %v778, %v776
    %v803 = vpack.c.b16 %v781, %v779
    %v804 = vpack.c.b16 %v782, %v780
    %v805 = vpack.c.b16 %v785, %v783
    %v806 = vpack.c.b16 %v786, %v784
    %v807 = vpack.c.b16 %v789, %v787
    %v808 = vpack.c.b16 %v790, %v788
    %v809 = vpack.c.b16 %v793, %v791
    %v810 = vpack.c.b16 %v794, %v792
    %827 = vmatpush.bf16.msra.mxu0 %v809
    %828 = vmatpush.bf16.msra.mxu0 %v807
    %829 = vmatpush.bf16.msra.mxu0 %v805
    %830 = vmatpush.bf16.msra.mxu0 %v803
    %831 = vmatpush.bf16.msra.mxu0 %v801
    %832 = vmatpush.bf16.msra.mxu0 %v799
    %833 = vmatpush.bf16.msra.mxu0 %v797
    %834 = vmatpush.bf16.msra.mxu0 %v795
    %835 = vmatmul.bf16.gmra.mxu0 %v723
    %v836 = vpop.f32.mrf.mxu0
    %v837 = vadd.f32 %v743, %v836
    %v838 = vpop.f32.mrf.mxu0
    %v839 = vadd.f32 %v743, %v838
    %840 = vmatmul.bf16.gmra.mxu0 %v724
    %v841 = vpop.f32.mrf.mxu0
    %v842 = vadd.f32 %v743, %v841
    %v843 = vpop.f32.mrf.mxu0
    %v844 = vadd.f32 %v743, %v843
    %845 = vdwg.mxu0
    %846 = vmatpush.bf16.msra.mxu0 %v810
    %847 = vmatpush.bf16.msra.mxu0 %v808
    %848 = vmatpush.bf16.msra.mxu0 %v806
    %849 = vmatpush.bf16.msra.mxu0 %v804
    %850 = vmatpush.bf16.msra.mxu0 %v802
    %851 = vmatpush.bf16.msra.mxu0 %v800
    %852 = vmatpush.bf16.msra.mxu0 %v798
    %853 = vmatpush.bf16.msra.mxu0 %v796
    %854 = vmatmul.bf16.gmra.mxu0 %v723
    %v855 = vpop.f32.mrf.mxu0
    %v856 = vadd.f32 %v744, %v855
    %v857 = vpop.f32.mrf.mxu0
    %v858 = vadd.f32 %v744, %v857
    %859 = vmatmul.bf16.gmra.mxu0 %v724
    %v860 = vpop.f32.mrf.mxu0
    %v861 = vadd.f32 %v744, %v860
    %v862 = vpop.f32.mrf.mxu0
    %v863 = vadd.f32 %v744, %v862
    %864 = vdwg.mxu0
    %v865 = vmax.f32 %v837, 0.0
    %v866 = vmax.f32 %v856, 0.0
    %v867 = vmax.f32 %v839, 0.0
    %v868 = vmax.f32 %v858, 0.0
    %v869 = vmax.f32 %v842, 0.0
    %v870 = vmax.f32 %v861, 0.0
    %v871 = vmax.f32 %v844, 0.0
    %v872 = vmax.f32 %v863, 0.0
    %v873 = vpack.c.bf16 %v867, %v865
    %v874 = vpack.c.bf16 %v868, %v866
    %v875 = vpack.c.bf16 %v871, %v869
    %v876 = vpack.c.bf16 %v872, %v870
    %v877 = vld [vmem:[#allocation14] sm:$0xf]
    %v878 = vld [vmem:[#allocation14 + $0x4] sm:$0xf]
    %v879 = vld [vmem:[#allocation14 + $0x8] sm:$0xf]
    %v880 = vld [vmem:[#allocation14 + $0xc] sm:$0xf]
    %v881 = vld [vmem:[#allocation14 + $0x10] sm:$0xf]
    %v882 = vld [vmem:[#allocation14 + $0x14] sm:$0xf]
    %v883 = vld [vmem:[#allocation14 + $0x18] sm:$0xf]
    %v884 = vld [vmem:[#allocation14 + $0x1c] sm:$0xf]
    %v885 = vld [vmem:[#allocation14 + $0x20] sm:$0xf]
    %v886 = vld [vmem:[#allocation14 + $0x24] sm:$0xf]
    %v887 = vld [vmem:[#allocation14 + $0x28] sm:$0xf]
    %v888 = vld [vmem:[#allocation14 + $0x2c] sm:$0xf]
    %v889 = vld [vmem:[#allocation14 + $0x30] sm:$0xf]
    %v890 = vld [vmem:[#allocation14 + $0x34] sm:$0xf]
    %v891 = vld [vmem:[#allocation14 + $0x38] sm:$0xf]
    %v892 = vld [vmem:[#allocation14 + $0x3c] sm:$0xf]
    %v893 = vld [vmem:[#allocation14 + $0x40] sm:$0xf]
    %v894 = vld [vmem:[#allocation14 + $0x44] sm:$0xf]
    %v895 = vld [vmem:[#allocation14 + $0x48] sm:$0xf]
    %v896 = vld [vmem:[#allocation14 + $0x4c] sm:$0xf]
    %v897 = vld [vmem:[#allocation14 + $0x50] sm:$0xf]
    %v898 = vld [vmem:[#allocation14 + $0x54] sm:$0xf]
    %v899 = vld [vmem:[#allocation14 + $0x58] sm:$0xf]
    %v900 = vld [vmem:[#allocation14 + $0x5c] sm:$0xf]
    %v901 = vld [vmem:[#allocation14 + $0x60] sm:$0xf]
    %v902 = vld [vmem:[#allocation14 + $0x64] sm:$0xf]
    %v903 = vld [vmem:[#allocation14 + $0x68] sm:$0xf]
    %v904 = vld [vmem:[#allocation14 + $0x6c] sm:$0xf]
    %v905 = vld [vmem:[#allocation14 + $0x70] sm:$0xf]
    %v906 = vld [vmem:[#allocation14 + $0x74] sm:$0xf]
    %v907 = vld [vmem:[#allocation14 + $0x78] sm:$0xf]
    %v908 = vld [vmem:[#allocation14 + $0x7c] sm:$0xf]
    %v909 = vld [vmem:[%s12] sm:$0x1]
    %v911 = vperm.slane %v909, 0
    %v945 = vunpack.c.l.b16 %v877
    %v946 = vunpack.c.l.b16 %v878
    %v947 = vunpack.c.l.b16 %v879
    %v948 = vunpack.c.l.b16 %v880
    %v949 = vunpack.c.l.b16 %v881
    %v950 = vunpack.c.l.b16 %v882
    %v951 = vunpack.c.l.b16 %v883
    %v952 = vunpack.c.l.b16 %v884
    %v953 = vunpack.c.l.b16 %v885
    %v954 = vunpack.c.l.b16 %v886
    %v955 = vunpack.c.l.b16 %v887
    %v956 = vunpack.c.l.b16 %v888
    %v957 = vunpack.c.l.b16 %v889
    %v958 = vunpack.c.l.b16 %v890
    %v959 = vunpack.c.l.b16 %v891
    %v960 = vunpack.c.l.b16 %v892
    %v961 = vunpack.c.l.b16 %v893
    %v962 = vunpack.c.l.b16 %v894
    %v963 = vunpack.c.l.b16 %v895
    %v964 = vunpack.c.l.b16 %v896
    %v965 = vunpack.c.l.b16 %v897
    %v966 = vunpack.c.l.b16 %v898
    %v967 = vunpack.c.l.b16 %v899
    %v968 = vunpack.c.l.b16 %v900
    %v969 = vunpack.c.l.b16 %v901
    %v970 = vunpack.c.l.b16 %v902
    %v971 = vunpack.c.l.b16 %v903
    %v972 = vunpack.c.l.b16 %v904
    %v973 = vunpack.c.l.b16 %v905
    %v974 = vunpack.c.l.b16 %v906
    %v975 = vunpack.c.l.b16 %v907
    %v976 = vunpack.c.l.b16 %v908
    %v977 = vpack.c.b16 %v946, %v945
    %v978 = vpack.c.b16 %v948, %v947
    %v979 = vpack.c.b16 %v950, %v949
    %v980 = vpack.c.b16 %v952, %v951
    %v981 = vpack.c.b16 %v954, %v953
    %v982 = vpack.c.b16 %v956, %v955
    %v983 = vpack.c.b16 %v958, %v957
    %v984 = vpack.c.b16 %v960, %v959
    %v985 = vpack.c.b16 %v962, %v961
    %v986 = vpack.c.b16 %v964, %v963
    %v987 = vpack.c.b16 %v966, %v965
    %v988 = vpack.c.b16 %v968, %v967
    %v989 = vpack.c.b16 %v970, %v969
    %v990 = vpack.c.b16 %v972, %v971
    %v991 = vpack.c.b16 %v974, %v973
    %v992 = vpack.c.b16 %v976, %v975
    %1009 = vmatpush.bf16.msra.mxu0 %v984
    %1010 = vmatpush.bf16.msra.mxu0 %v983
    %1011 = vmatpush.bf16.msra.mxu0 %v982
    %1012 = vmatpush.bf16.msra.mxu0 %v981
    %1013 = vmatpush.bf16.msra.mxu0 %v980
    %1014 = vmatpush.bf16.msra.mxu0 %v979
    %1015 = vmatpush.bf16.msra.mxu0 %v978
    %1016 = vmatpush.bf16.msra.mxu0 %v977
    %1017 = vmatmul.bf16.gmra.mxu0 %v873
    %v1018 = vpop.f32.mrf.mxu0
    %v1019 = vadd.f32 %v911, %v1018
    %v1020 = vpop.f32.mrf.mxu0
    %v1021 = vadd.f32 %v911, %v1020
    %1022 = vmatmul.bf16.gmra.mxu0 %v875
    %v1023 = vpop.f32.mrf.mxu0
    %v1024 = vadd.f32 %v911, %v1023
    %v1025 = vpop.f32.mrf.mxu0
    %v1026 = vadd.f32 %v911, %v1025
    %1027 = vdwg.mxu0
    %1028 = vmatpush.bf16.msra.mxu0 %v992
    %1029 = vmatpush.bf16.msra.mxu0 %v991
    %1030 = vmatpush.bf16.msra.mxu0 %v990
    %1031 = vmatpush.bf16.msra.mxu0 %v989
    %1032 = vmatpush.bf16.msra.mxu0 %v988
    %1033 = vmatpush.bf16.msra.mxu0 %v987
    %1034 = vmatpush.bf16.msra.mxu0 %v986
    %1035 = vmatpush.bf16.msra.mxu0 %v985
    %1036 = vmatmul.bf16.gmra.mxu0 %v874
    %v1037 = vpop.f32.mrf.mxu0
    %v1038 = vadd.f32 %v1019, %v1037
    %v1039 = vpop.f32.mrf.mxu0
    %v1040 = vadd.f32 %v1021, %v1039
    %1041 = vmatmul.bf16.gmra.mxu0 %v876
    %v1042 = vpop.f32.mrf.mxu0
    %v1043 = vadd.f32 %v1024, %v1042
    %v1044 = vpop.f32.mrf.mxu0
    %v1045 = vadd.f32 %v1026, %v1044
    %1046 = vdwg.mxu0
    %v1047 = vadd.f32 %v719, %v1038
    %v1048 = vadd.f32 %v720, %v1040
    %v1049 = vadd.f32 %v721, %v1043
    %v1050 = vadd.f32 %v722, %v1045
    %v1051 = vld [vmem:[%s13] sm:$0x1]
    %v1052 = vld [vmem:[%s14] sm:$0x1]
    %1053 = vadd.xlane.f32.xlu0 %v1047
    %v1054 = vpop.xlane.xlu0 %1053
    %1055 = vadd.xlane.f32.xlu0 %v1048
    %v1056 = vpop.xlane.xlu0 %1055
    %1057 = vadd.xlane.f32.xlu0 %v1049
    %v1058 = vpop.xlane.xlu0 %1057
    %1059 = vadd.xlane.f32.xlu0 %v1050
    %v1060 = vpop.xlane.xlu0 %1059
    %v1061 = vmul.f32 %v1054, %v636
    %v1062 = vmul.f32 %v1056, %v636
    %v1063 = vmul.f32 %v1058, %v636
    %v1064 = vmul.f32 %v1060, %v636
    %v1065 = vsub.f32 %v1047, %v1061
    %v1066 = vsub.f32 %v1048, %v1062
    %v1067 = vsub.f32 %v1049, %v1063
    %v1068 = vsub.f32 %v1050, %v1064
    %v1069 = vmul.f32 %v1065, %v1065
    %v1070 = vmul.f32 %v1066, %v1066
    %v1071 = vmul.f32 %v1067, %v1067
    %v1072 = vmul.f32 %v1068, %v1068
    %1073 = vadd.xlane.f32.xlu0 %v1069
    %v1074 = vpop.xlane.xlu0 %1073
    %1075 = vadd.xlane.f32.xlu0 %v1070
    %v1076 = vpop.xlane.xlu0 %1075
    %1077 = vadd.xlane.f32.xlu0 %v1071
    %v1078 = vpop.xlane.xlu0 %1077
    %1079 = vadd.xlane.f32.xlu0 %v1072
    %v1080 = vpop.xlane.xlu0 %1079
    %v1081 = vmul.f32 %v1074, %v636
    %v1082 = vmul.f32 %v1076, %v636
    %v1083 = vmul.f32 %v1078, %v636
    %v1084 = vmul.f32 %v1080, %v636
    %v1085 = vadd.f32 %v1081, 1e-05
    %v1086 = vadd.f32 %v1082, 1e-05
    %v1087 = vadd.f32 %v1083, 1e-05
    %v1088 = vadd.f32 %v1084, 1e-05
    %v1089 = vrsqrt.pop %v1085
    %v1090 = vmul.f32 %v1089, %v1085
    %v1091 = vmul.f32 %v1090, %v1089
    %v1092 = vmul.f32 0.5, %v1091
    %v1093 = vsub.f32 1.5, %v1092
    %v1094 = vmul.f32 %v1089, %v1093
    %vm1095 = vweird.f32 %v1085
    %vm1096 = vweird.f32 %v1089
    %vm1097 = vmor %vm1095, %vm1096
    %v1098 = vsel %vm1097, %v1089, %v1094
    %v1099 = vrsqrt.pop %v1086
    %v1100 = vmul.f32 %v1099, %v1086
    %v1101 = vmul.f32 %v1100, %v1099
    %v1102 = vmul.f32 0.5, %v1101
    %v1103 = vsub.f32 1.5, %v1102
    %v1104 = vmul.f32 %v1099, %v1103
    %vm1105 = vweird.f32 %v1086
    %vm1106 = vweird.f32 %v1099
    %vm1107 = vmor %vm1105, %vm1106
    %v1108 = vsel %vm1107, %v1099, %v1104
    %v1109 = vrsqrt.pop %v1087
    %v1110 = vmul.f32 %v1109, %v1087
    %v1111 = vmul.f32 %v1110, %v1109
    %v1112 = vmul.f32 0.5, %v1111
    %v1113 = vsub.f32 1.5, %v1112
    %v1114 = vmul.f32 %v1109, %v1113
    %vm1115 = vweird.f32 %v1087
    %vm1116 = vweird.f32 %v1109
    %vm1117 = vmor %vm1115, %vm1116
    %v1118 = vsel %vm1117, %v1109, %v1114
    %v1119 = vrsqrt.pop %v1088
    %v1120 = vmul.f32 %v1119, %v1088
    %v1121 = vmul.f32 %v1120, %v1119
    %v1122 = vmul.f32 0.5, %v1121
    %v1123 = vsub.f32 1.5, %v1122
    %v1124 = vmul.f32 %v1119, %v1123
    %vm1125 = vweird.f32 %v1088
    %vm1126 = vweird.f32 %v1119
    %vm1127 = vmor %vm1125, %vm1126
    %v1128 = vsel %vm1127, %v1119, %v1124
    %v1129 = vmul.f32 %v1065, %v1098
    %v1130 = vmul.f32 %v1066, %v1108
    %v1131 = vmul.f32 %v1067, %v1118
    %v1132 = vmul.f32 %v1068, %v1128
    %v1134 = vperm.slane %v1051, 0
    %v1136 = vmul.f32 %v1129, %v1134
    %v1137 = vmul.f32 %v1130, %v1134
    %v1138 = vmul.f32 %v1131, %v1134
    %v1139 = vmul.f32 %v1132, %v1134
    %v1141 = vperm.slane %v1052, 0
    %v1143 = vadd.f32 %v1136, %v1141
    %v1144 = vadd.f32 %v1137, %v1141
    %v1145 = vadd.f32 %v1138, %v1141
    %v1146 = vadd.f32 %v1139, %v1141
    %1147 = vst [vmem:[#allocation16] sm:$0xff] %v1143
    %1148 = vst [vmem:[#allocation16 + $0x8] sm:$0xff] %v1144
    %1149 = vst [vmem:[#allocation16 + $0x10] sm:$0xff] %v1145
    %1150 = vst [vmem:[#allocation16 + $0x18] sm:$0xff] %v1146
    // Predicated region
    $region94: #{tpu_custom_call.1} parent=1 // pred_check
      _
    $region95: #{tpu_custom_call.1} parent=1 // pred_check_branch
      %1152 = sbr.rel (0) target = $region97
    $region96: #{tpu_custom_call.1} parent=1 // pred_region
      %1154 = vsyncadd [#allocation4], 0
      %s1155 = sshll.u32 [#allocation16], 4
      %s1156 = int_to_ptr.vmem [resolvable:$true] %s1155
      %s1157 = sshll.u32 %s15, 4
      %s1158 = int_to_ptr.hbm [resolvable:$true] %s1157
      %1163 = dma.vmem_to_hbm [thread:$0]  %s1156, 512, %s1158, [#allocation4], 128, 128, 8
    $region97: #{tpu_custom_call.1} parent=1 // pred_fallthru
      _
    // Predicated region
    $region98: #{tpu_custom_call.1} parent=1 // pred_check
      _
    $region99: #{tpu_custom_call.1} parent=1 // pred_check_branch
      %1165 = sbr.rel (0) target = $region101
    $region100: #{tpu_custom_call.1} parent=1 // pred_region
      %1167 = dma.done [#allocation4], 512
    $region101: #{tpu_custom_call.1} parent=1 // pred_fallthru
      _
    %1168 = vsyncpa [#allocation3], 1
    %1169 = vsyncpa [#allocation6], 1
    %1170 = vsyncpa [#allocation9], 1
    %1171 = vsyncpa [#allocation12], 1
    %1172 = vsyncpa [#allocation15], 1
    %1173 = vsyncpa [#allocation4], 1

// kernel: tpu_custom_call.1
$region0: #{tpu_custom_call.1}
  #allocation0 [shape = 'u32[]', space=smem, size = 0x4, offset = 0x4, fixed_abs, tag = 'smem constant byte address 0x4 - core index']
  #allocation1 [shape = 'u32[72,128]{1,0:T(1,128)}', space=vmem, size = 0x9000, scoped, tag = 'internal scratch']
  %s0 = inlined_call_operand.hbm [shape: bf16[4,8,128], index: 0, kind: input, shape index: {}]
  %s1 = inlined_call_operand.hbm [shape: f32[1,1,32], index: 1, kind: input, shape index: {}]
  %s2 = inlined_call_operand.hbm [shape: f32[32,32], index: 2, kind: input, shape index: {}]
  %s3 = inlined_call_operand.hbm [shape: bf16[128,384], index: 3, kind: input, shape index: {}]
  %s4 = inlined_call_operand.vmem [shape: f32[1,384], index: 4, kind: input, shape index: {}]
  %s5 = inlined_call_operand.hbm [shape: bf16[128,128], index: 5, kind: input, shape index: {}]
  %s6 = inlined_call_operand.hbm [shape: f32[1,128], index: 6, kind: input, shape index: {}]
  %s7 = inlined_call_operand.vmem [shape: f32[1,128], index: 7, kind: input, shape index: {}]
  %s8 = inlined_call_operand.vmem [shape: f32[1,128], index: 8, kind: input, shape index: {}]
  %s9 = inlined_call_operand.hbm [shape: bf16[128,256], index: 9, kind: input, shape index: {}]
  %s10 = inlined_call_operand.vmem [shape: f32[1,256], index: 10, kind: input, shape index: {}]
  %s11 = inlined_call_operand.hbm [shape: bf16[256,128], index: 11, kind: input, shape index: {}]
  %s12 = inlined_call_operand.vmem [shape: f32[1,128], index: 12, kind: input, shape index: {}]
  %s13 = inlined_call_operand.vmem [shape: f32[1,128], index: 13, kind: input, shape index: {}]
  %s14 = inlined_call_operand.vmem [shape: f32[1,128], index: 14, kind: input, shape index: {}]
  %s15 = inlined_call_operand.hbm [shape: f32[4,8,128], index: 15, kind: output, shape index: {}]
  %s16 = sld [smem:[#allocation0]]
  $region102: #{tpu_custom_call.1} parent=0
    _
  %s18 = ssub.s32 1, %s16
  %s19 = scalar_select 0, %s18, %s16
  $region1: #{tpu_custom_call.1} parent=0
    #allocation2 [shape = 'u8[8192]{0}', space=vmem, size = 0x2000, scoped, tag = 'input window, operand 0, single buffered']
    #allocation3 [shape = 's32[1]{0}', space=sflag, size = 0x4, scoped, tag = 'scoped memory for tpu_custom_call.1']
    #allocation4 [shape = 's32[1]{0}', space=sflag, size = 0x4, scoped, tag = 'scoped memory for tpu_custom_call.1']
    #allocation5 [shape = 'u8[512]{0}', space=vmem, size = 0x400, scoped, tag = 'input window, operand 1, single buffered']
    #allocation6 [shape = 's32[1]{0}', space=sflag, size = 0x4, scoped, tag = 'scoped memory for tpu_custom_call.1']
    #allocation7 [shape = 'u8[16384]{0}', space=vmem, size = 0x4000, scoped, tag = 'input window, operand 2, single buffered']
    #allocation8 [shape = 'u8[98304]{0}', space=vmem, size = 0x18000, scoped, tag = 'input window, operand 3, single buffered']
    #allocation9 [shape = 's32[1]{0}', space=sflag, size = 0x4, scoped, tag = 'scoped memory for tpu_custom_call.1']
    #allocation10 [shape = 'u8[32768]{0}', space=vmem, size = 0x8000, scoped, tag = 'input window, operand 5, single buffered']
    #allocation11 [shape = 'u8[512]{0}', space=vmem, size = 0x400, scoped, tag = 'input window, operand 6, single buffered']
    #allocation12 [shape = 's32[1]{0}', space=sflag, size = 0x4, scoped, tag = 'scoped memory for tpu_custom_call.1']
    #allocation13 [shape = 'u8[65536]{0}', space=vmem, size = 0x10000, scoped, tag = 'input window, operand 9, single buffered']
    #allocation14 [shape = 'u8[65536]{0}', space=vmem, size = 0x10000, scoped, tag = 'input window, operand 11, single buffered']
    #allocation15 [shape = 's32[1]{0}', space=sflag, size = 0x4, scoped, tag = 'scoped memory for tpu_custom_call.1']
    #allocation16 [shape = 'u8[16384]{0}', space=vmem, size = 0x4000, scoped, tag = 'output window, operand 0, single buffered']
    %20 = vsyncpa [#allocation3], 0
    %21 = vsyncpa [#allocation6], 0
    %22 = vsyncpa [#allocation9], 0
    %23 = vsyncpa [#allocation12], 0
    %24 = vsyncpa [#allocation15], 0
    %25 = vsyncpa [#allocation4], 0
    // Predicated region
    $region2: #{tpu_custom_call.1} parent=1 // pred_check
      _
    $region3: #{tpu_custom_call.1} parent=1 // pred_check_branch
      %27 = sbr.rel (0) target = $region5
    $region4: #{tpu_custom_call.1} parent=1 // pred_region
      %29 = vsyncadd [#allocation3], 0
      %s30 = sshll.u32 %s0, 4
      %s31 = int_to_ptr.hbm [resolvable:$true] %s30
      %s32 = sshll.u32 [#allocation2], 4
      %s33 = int_to_ptr.vmem [resolvable:$true] %s32
      %38 = dma.hbm_to_vmem [thread:$0]  %s31, 256, %s33, [#allocation3], 64, 64, 4
    $region5: #{tpu_custom_call.1} parent=1 // pred_fallthru
      _
    // Predicated region
    $region6: #{tpu_custom_call.1} parent=1 // pred_check
      _
    $region7: #{tpu_custom_call.1} parent=1 // pred_check_branch
      %40 = sbr.rel (0) target = $region9
    $region8: #{tpu_custom_call.1} parent=1 // pred_region
      %42 = vsyncadd [#allocation6], 0
      %s44 = sshll.u32 %s1, 4
      %s45 = int_to_ptr.hbm [resolvable:$true] %s44
      %s46 = sshll.u32 [#allocation5], 4
      %s47 = int_to_ptr.vmem [resolvable:$true] %s46
      %49 = dma.hbm_to_vmem [thread:$0]  %s45, 16, %s47, [#allocation6]
    $region9: #{tpu_custom_call.1} parent=1 // pred_fallthru
      _
    // Predicated region
    $region10: #{tpu_custom_call.1} parent=1 // pred_check
      _
    $region11: #{tpu_custom_call.1} parent=1 // pred_check_branch
      %51 = sbr.rel (0) target = $region13
    $region12: #{tpu_custom_call.1} parent=1 // pred_region
      %53 = vsyncadd [#allocation6], 0
      %s54 = sshll.u32 %s2, 4
      %s55 = int_to_ptr.hbm [resolvable:$true] %s54
      %s56 = sshll.u32 [#allocation7], 4
      %s57 = int_to_ptr.vmem [resolvable:$true] %s56
      %62 = dma.hbm_to_vmem [thread:$0]  %s55, 512, %s57, [#allocation6], 128, 128, 8
    $region13: #{tpu_custom_call.1} parent=1 // pred_fallthru
      _
    // Predicated region
    $region14: #{tpu_custom_call.1} parent=1 // pred_check
      _
    $region15: #{tpu_custom_call.1} parent=1 // pred_check_branch
      %64 = sbr.rel (0) target = $region17
    $region16: #{tpu_custom_call.1} parent=1 // pred_region
      %66 = vsyncadd [#allocation9], 0
      %s67 = sshll.u32 %s3, 4
      %s68 = int_to_ptr.hbm [resolvable:$true] %s67
      %s69 = sshll.u32 [#allocation8], 4
      %s70 = int_to_ptr.vmem [resolvable:$true] %s69
      %75 = dma.hbm_to_vmem [thread:$0]  %s68, 3072, %s70, [#allocation9], 192, 192, 12
    $region17: #{tpu_custom_call.1} parent=1 // pred_fallthru
      _
    // Predicated region
    $region18: #{tpu_custom_call.1} parent=1 // pred_check
      _
    $region19: #{tpu_custom_call.1} parent=1 // pred_check_branch
      %77 = sbr.rel (0) target = $region21
    $region20: #{tpu_custom_call.1} parent=1 // pred_region
      _
    $region21: #{tpu_custom_call.1} parent=1 // pred_fallthru
      _
    // Predicated region
    $region22: #{tpu_custom_call.1} parent=1 // pred_check
      _
    $region23: #{tpu_custom_call.1} parent=1 // pred_check_branch
      %79 = sbr.rel (0) target = $region25
    $region24: #{tpu_custom_call.1} parent=1 // pred_region
      %81 = vsyncadd [#allocation9], 0
      %s82 = sshll.u32 %s5, 4
      %s83 = int_to_ptr.hbm [resolvable:$true] %s82
      %s84 = sshll.u32 [#allocation10], 4
      %s85 = int_to_ptr.vmem [resolvable:$true] %s84
      %90 = dma.hbm_to_vmem [thread:$0]  %s83, 1024, %s85, [#allocation9], 64, 64, 4
    $region25: #{tpu_custom_call.1} parent=1 // pred_fallthru
      _
    // Predicated region
    $region26: #{tpu_custom_call.1} parent=1 // pred_check
      _
    $region27: #{tpu_custom_call.1} parent=1 // pred_check_branch
      %92 = sbr.rel (0) target = $region29
    $region28: #{tpu_custom_call.1} parent=1 // pred_region
      %94 = vsyncadd [#allocation12], 0
      %s96 = sshll.u32 %s6, 4
      %s97 = int_to_ptr.hbm [resolvable:$true] %s96
      %s98 = sshll.u32 [#allocation11], 4
      %s99 = int_to_ptr.vmem [resolvable:$true] %s98
      %101 = dma.hbm_to_vmem [thread:$0]  %s97, 16, %s99, [#allocation12]
    $region29: #{tpu_custom_call.1} parent=1 // pred_fallthru
      _
    // Predicated region
    $region30: #{tpu_custom_call.1} parent=1 // pred_check
      _
    $region31: #{tpu_custom_call.1} parent=1 // pred_check_branch
      %103 = sbr.rel (0) target = $region33
    $region32: #{tpu_custom_call.1} parent=1 // pred_region
      _
    $region33: #{tpu_custom_call.1} parent=1 // pred_fallthru
      _
    // Predicated region
    $region34: #{tpu_custom_call.1} parent=1 // pred_check
      _
    $region35: #{tpu_custom_call.1} parent=1 // pred_check_branch
      %105 = sbr.rel (0) target = $region37
    $region36: #{tpu_custom_call.1} parent=1 // pred_region
      _
    $region37: #{tpu_custom_call.1} parent=1 // pred_fallthru
      _
    // Predicated region
    $region38: #{tpu_custom_call.1} parent=1 // pred_check
      _
    $region39: #{tpu_custom_call.1} parent=1 // pred_check_branch
      %107 = sbr.rel (0) target = $region41
    $region40: #{tpu_custom_call.1} parent=1 // pred_region
      %109 = vsyncadd [#allocation12], 0
      %s110 = sshll.u32 %s9, 4
      %s111 = int_to_ptr.hbm [resolvable:$true] %s110
      %s112 = sshll.u32 [#allocation13], 4
      %s113 = int_to_ptr.vmem [resolvable:$true] %s112
      %118 = dma.hbm_to_vmem [thread:$0]  %s111, 2048, %s113, [#allocation12], 128, 128, 8
    $region41: #{tpu_custom_call.1} parent=1 // pred_fallthru
      _
    // Predicated region
    $region42: #{tpu_custom_call.1} parent=1 // pred_check
      _
    $region43: #{tpu_custom_call.1} parent=1 // pred_check_branch
      %120 = sbr.rel (0) target = $region45
    $region44: #{tpu_custom_call.1} parent=1 // pred_region
      _
    $region45: #{tpu_custom_call.1} parent=1 // pred_fallthru
      _
    // Predicated region
    $region46: #{tpu_custom_call.1} parent=1 // pred_check
      _
    $region47: #{tpu_custom_call.1} parent=1 // pred_check_branch
      %122 = sbr.rel (0) target = $region49
    $region48: #{tpu_custom_call.1} parent=1 // pred_region
      %124 = vsyncadd [#allocation15], 0
      %s125 = sshll.u32 %s11, 4
      %s126 = int_to_ptr.hbm [resolvable:$true] %s125
      %s127 = sshll.u32 [#allocation14], 4
      %s128 = int_to_ptr.vmem [resolvable:$true] %s127
      %133 = dma.hbm_to_vmem [thread:$0]  %s126, 2048, %s128, [#allocation15], 64, 64, 4
    $region49: #{tpu_custom_call.1} parent=1 // pred_fallthru
      _
    // Predicated region
    $region50: #{tpu_custom_call.1} parent=1 // pred_check
      _
    $region51: #{tpu_custom_call.1} parent=1 // pred_check_branch
      %135 = sbr.rel (0) target = $region53
    $region52: #{tpu_custom_call.1} parent=1 // pred_region
      _
    $region53: #{tpu_custom_call.1} parent=1 // pred_fallthru
      _
    // Predicated region
    $region54: #{tpu_custom_call.1} parent=1 // pred_check
      _
    $region55: #{tpu_custom_call.1} parent=1 // pred_check_branch
      %137 = sbr.rel (0) target = $region57
    $region56: #{tpu_custom_call.1} parent=1 // pred_region
      _
    $region57: #{tpu_custom_call.1} parent=1 // pred_fallthru
      _
    // Predicated region
    $region58: #{tpu_custom_call.1} parent=1 // pred_check
      _
    $region59: #{tpu_custom_call.1} parent=1 // pred_check_branch
      %139 = sbr.rel (0) target = $region61
    $region60: #{tpu_custom_call.1} parent=1 // pred_region
      _
    $region61: #{tpu_custom_call.1} parent=1 // pred_fallthru
      _
    // Predicated region
    $region62: #{tpu_custom_call.1} parent=1 // pred_check
      _
    $region63: #{tpu_custom_call.1} parent=1 // pred_check_branch
      %141 = sbr.rel (0) target = $region65
    $region64: #{tpu_custom_call.1} parent=1 // pred_region
      %143 = dma.done [#allocation3], 256
    $region65: #{tpu_custom_call.1} parent=1 // pred_fallthru
      _
    // Predicated region
    $region66: #{tpu_custom_call.1} parent=1 // pred_check
      _
    $region67: #{tpu_custom_call.1} parent=1 // pred_check_branch
      %145 = sbr.rel (0) target = $region69
    $region68: #{tpu_custom_call.1} parent=1 // pred_region
      %147 = dma.done [#allocation6], 16
    $region69: #{tpu_custom_call.1} parent=1 // pred_fallthru
      _
    // Predicated region
    $region70: #{tpu_custom_call.1} parent=1 // pred_check
      _
    $region71: #{tpu_custom_call.1} parent=1 // pred_check_branch
      %149 = sbr.rel (0) target = $region73
    $region72: #{tpu_custom_call.1} parent=1 // pred_region
      %151 = dma.done [#allocation6], 512
    $region73: #{tpu_custom_call.1} parent=1 // pred_fallthru
      _
    // Predicated region
    $region74: #{tpu_custom_call.1} parent=1 // pred_check
      _
    $region75: #{tpu_custom_call.1} parent=1 // pred_check_branch
      %153 = sbr.rel (0) target = $region77
    $region76: #{tpu_custom_call.1} parent=1 // pred_region
      %155 = dma.done [#allocation9], 3072
    $region77: #{tpu_custom_call.1} parent=1 // pred_fallthru
      _
    // Predicated region
    $region78: #{tpu_custom_call.1} parent=1 // pred_check
      _
    $region79: #{tpu_custom_call.1} parent=1 // pred_check_branch
      %157 = sbr.rel (0) target = $region81
    $region80: #{tpu_custom_call.1} parent=1 // pred_region
      %159 = dma.done [#allocation9], 1024
    $region81: #{tpu_custom_call.1} parent=1 // pred_fallthru
      _
    // Predicated region
    $region82: #{tpu_custom_call.1} parent=1 // pred_check
      _
    $region83: #{tpu_custom_call.1} parent=1 // pred_check_branch
      %161 = sbr.rel (0) target = $region85
    $region84: #{tpu_custom_call.1} parent=1 // pred_region
      %163 = dma.done [#allocation12], 16
    $region85: #{tpu_custom_call.1} parent=1 // pred_fallthru
      _
    // Predicated region
    $region86: #{tpu_custom_call.1} parent=1 // pred_check
      _
    $region87: #{tpu_custom_call.1} parent=1 // pred_check_branch
      %165 = sbr.rel (0) target = $region89
    $region88: #{tpu_custom_call.1} parent=1 // pred_region
      %167 = dma.done [#allocation12], 2048
    $region89: #{tpu_custom_call.1} parent=1 // pred_fallthru
      _
    // Predicated region
    $region90: #{tpu_custom_call.1} parent=1 // pred_check
      _
    $region91: #{tpu_custom_call.1} parent=1 // pred_check_branch
      %169 = sbr.rel (0) target = $region93
    $region92: #{tpu_custom_call.1} parent=1 // pred_region
      %171 = dma.done [#allocation15], 2048
    $region93: #{tpu_custom_call.1} parent=1 // pred_fallthru
      _
    %v173 = vld [vmem:[#allocation2] sm:$0xf]
    %v174 = vld [vmem:[#allocation2 + $0x4] sm:$0xf]
    %v175 = vld [vmem:[#allocation2 + $0x8] sm:$0xf]
    %v176 = vld [vmem:[#allocation2 + $0xc] sm:$0xf]
    %v177 = vunpack.c.l.bf16 %v173
    %v178 = vunpack.c.l.bf16 %v174
    %v179 = vunpack.c.l.bf16 %v175
    %v180 = vunpack.c.l.bf16 %v176
    %v181 = vld [vmem:[#allocation8] sm:$0xff]
    %v182 = vld [vmem:[#allocation8 + $0x8] sm:$0xf]
    %v183 = vld [vmem:[#allocation8 + $0xc] sm:$0xff]
    %v184 = vld [vmem:[#allocation8 + $0x14] sm:$0xf]
    %v185 = vld [vmem:[#allocation8 + $0x18] sm:$0xff]
    %v186 = vld [vmem:[#allocation8 + $0x20] sm:$0xf]
    %v187 = vld [vmem:[#allocation8 + $0x24] sm:$0xff]
    %v188 = vld [vmem:[#allocation8 + $0x2c] sm:$0xf]
    %v189 = vld [vmem:[#allocation8 + $0x30] sm:$0xff]
    %v190 = vld [vmem:[#allocation8 + $0x38] sm:$0xf]
    %v191 = vld [vmem:[#allocation8 + $0x3c] sm:$0xff]
    %v192 = vld [vmem:[#allocation8 + $0x44] sm:$0xf]
    %v193 = vld [vmem:[#allocation8 + $0x48] sm:$0xff]
    %v194 = vld [vmem:[#allocation8 + $0x50] sm:$0xf]
    %v195 = vld [vmem:[#allocation8 + $0x54] sm:$0xff]
    %v196 = vld [vmem:[#allocation8 + $0x5c] sm:$0xf]
    %v197 = vld [vmem:[#allocation8 + $0x60] sm:$0xff]
    %v198 = vld [vmem:[#allocation8 + $0x68] sm:$0xf]
    %v199 = vld [vmem:[#allocation8 + $0x6c] sm:$0xff]
    %v200 = vld [vmem:[#allocation8 + $0x74] sm:$0xf]
    %v201 = vld [vmem:[#allocation8 + $0x78] sm:$0xff]
    %v202 = vld [vmem:[#allocation8 + $0x80] sm:$0xf]
    %v203 = vld [vmem:[#allocation8 + $0x84] sm:$0xff]
    %v204 = vld [vmem:[#allocation8 + $0x8c] sm:$0xf]
    %v205 = vld [vmem:[#allocation8 + $0x90] sm:$0xff]
    %v206 = vld [vmem:[#allocation8 + $0x98] sm:$0xf]
    %v207 = vld [vmem:[#allocation8 + $0x9c] sm:$0xff]
    %v208 = vld [vmem:[#allocation8 + $0xa4] sm:$0xf]
    %v209 = vld [vmem:[#allocation8 + $0xa8] sm:$0xff]
    %v210 = vld [vmem:[#allocation8 + $0xb0] sm:$0xf]
    %v211 = vld [vmem:[#allocation8 + $0xb4] sm:$0xff]
    %v212 = vld [vmem:[#allocation8 + $0xbc] sm:$0xf]
    %v213 = vld [vmem:[%s4] sm:$0x7]
    %v215 = vperm.slane %v213, 0
    %v216 = vperm.slane %v213, 1
    %v217 = vperm.slane %v213, 2
    %v225 = vunpack.c.l.b16 %v173
    %v226 = vunpack.c.l.b16 %v174
    %v227 = vunpack.c.l.b16 %v175
    %v228 = vunpack.c.l.b16 %v176
    %v229 = vpack.c.b16 %v226, %v225
    %v230 = vpack.c.b16 %v228, %v227
    %v265 = vunpack.c.l.b16 %v181
    %v266 = vunpack.c.h.b16 %v181
    %v267 = vunpack.c.l.b16 %v182
    %v268 = vunpack.c.l.b16 %v183
    %v269 = vunpack.c.h.b16 %v183
    %v270 = vunpack.c.l.b16 %v184
    %v271 = vunpack.c.l.b16 %v185
    %v272 = vunpack.c.h.b16 %v185
    %v273 = vunpack.c.l.b16 %v186
    %v274 = vunpack.c.l.b16 %v187
    %v275 = vunpack.c.h.b16 %v187
    %v276 = vunpack.c.l.b16 %v188
    %v277 = vunpack.c.l.b16 %v189
    %v278 = vunpack.c.h.b16 %v189
    %v279 = vunpack.c.l.b16 %v190
    %v280 = vunpack.c.l.b16 %v191
    %v281 = vunpack.c.h.b16 %v191
    %v282 = vunpack.c.l.b16 %v192
    %v283 = vunpack.c.l.b16 %v193
    %v284 = vunpack.c.h.b16 %v193
    %v285 = vunpack.c.l.b16 %v194
    %v286 = vunpack.c.l.b16 %v195
    %v287 = vunpack.c.h.b16 %v195
    %v288 = vunpack.c.l.b16 %v196
    %v289 = vunpack.c.l.b16 %v197
    %v290 = vunpack.c.h.b16 %v197
    %v291 = vunpack.c.l.b16 %v198
    %v292 = vunpack.c.l.b16 %v199
    %v293 = vunpack.c.h.b16 %v199
    %v294 = vunpack.c.l.b16 %v200
    %v295 = vunpack.c.l.b16 %v201
    %v296 = vunpack.c.h.b16 %v201
    %v297 = vunpack.c.l.b16 %v202
    %v298 = vunpack.c.l.b16 %v203
    %v299 = vunpack.c.h.b16 %v203
    %v300 = vunpack.c.l.b16 %v204
    %v301 = vunpack.c.l.b16 %v205
    %v302 = vunpack.c.h.b16 %v205
    %v303 = vunpack.c.l.b16 %v206
    %v304 = vunpack.c.l.b16 %v207
    %v305 = vunpack.c.h.b16 %v207
    %v306 = vunpack.c.l.b16 %v208
    %v307 = vunpack.c.l.b16 %v209
    %v308 = vunpack.c.h.b16 %v209
    %v309 = vunpack.c.l.b16 %v210
    %v310 = vunpack.c.l.b16 %v211
    %v311 = vunpack.c.h.b16 %v211
    %v312 = vunpack.c.l.b16 %v212
    %v313 = vpack.c.b16 %v268, %v265
    %v314 = vpack.c.b16 %v269, %v266
    %v315 = vpack.c.b16 %v270, %v267
    %v316 = vpack.c.b16 %v274, %v271
    %v317 = vpack.c.b16 %v275, %v272
    %v318 = vpack.c.b16 %v276, %v273
    %v319 = vpack.c.b16 %v280, %v277
    %v320 = vpack.c.b16 %v281, %v278
    %v321 = vpack.c.b16 %v282, %v279
    %v322 = vpack.c.b16 %v286, %v283
    %v323 = vpack.c.b16 %v287, %v284
    %v324 = vpack.c.b16 %v288, %v285
    %v325 = vpack.c.b16 %v292, %v289
    %v326 = vpack.c.b16 %v293, %v290
    %v327 = vpack.c.b16 %v294, %v291
    %v328 = vpack.c.b16 %v298, %v295
    %v329 = vpack.c.b16 %v299, %v296
    %v330 = vpack.c.b16 %v300, %v297
    %v331 = vpack.c.b16 %v304, %v301
    %v332 = vpack.c.b16 %v305, %v302
    %v333 = vpack.c.b16 %v306, %v303
    %v334 = vpack.c.b16 %v310, %v307
    %v335 = vpack.c.b16 %v311, %v308
    %v336 = vpack.c.b16 %v312, %v309
    %361 = vmatpush.bf16.msra.mxu0 %v334
    %362 = vmatpush.bf16.msra.mxu0 %v331
    %363 = vmatpush.bf16.msra.mxu0 %v328
    %364 = vmatpush.bf16.msra.mxu0 %v325
    %365 = vmatpush.bf16.msra.mxu0 %v322
    %366 = vmatpush.bf16.msra.mxu0 %v319
    %367 = vmatpush.bf16.msra.mxu0 %v316
    %368 = vmatpush.bf16.msra.mxu0 %v313
    %369 = vmatmul.bf16.gmra.mxu0 %v229
    %v370 = vpop.f32.mrf.mxu0
    %v371 = vadd.f32 %v215, %v370
    %v372 = vpop.f32.mrf.mxu0
    %v373 = vadd.f32 %v215, %v372
    %374 = vmatmul.bf16.gmra.mxu0 %v230
    %v375 = vpop.f32.mrf.mxu0
    %v376 = vadd.f32 %v215, %v375
    %v377 = vpop.f32.mrf.mxu0
    %v378 = vadd.f32 %v215, %v377
    %379 = vdwg.mxu0
    %380 = vmatpush.bf16.msra.mxu0 %v335
    %381 = vmatpush.bf16.msra.mxu0 %v332
    %382 = vmatpush.bf16.msra.mxu0 %v329
    %383 = vmatpush.bf16.msra.mxu0 %v326
    %384 = vmatpush.bf16.msra.mxu0 %v323
    %385 = vmatpush.bf16.msra.mxu0 %v320
    %386 = vmatpush.bf16.msra.mxu0 %v317
    %387 = vmatpush.bf16.msra.mxu0 %v314
    %388 = vmatmul.bf16.gmra.mxu0 %v229
    %v389 = vpop.f32.mrf.mxu0
    %v390 = vadd.f32 %v216, %v389
    %v391 = vpop.f32.mrf.mxu0
    %v392 = vadd.f32 %v216, %v391
    %393 = vmatmul.bf16.gmra.mxu0 %v230
    %v394 = vpop.f32.mrf.mxu0
    %v395 = vadd.f32 %v216, %v394
    %v396 = vpop.f32.mrf.mxu0
    %v397 = vadd.f32 %v216, %v396
    %398 = vdwg.mxu0
    %399 = vmatpush.bf16.msra.mxu0 %v336
    %400 = vmatpush.bf16.msra.mxu0 %v333
    %401 = vmatpush.bf16.msra.mxu0 %v330
    %402 = vmatpush.bf16.msra.mxu0 %v327
    %403 = vmatpush.bf16.msra.mxu0 %v324
    %404 = vmatpush.bf16.msra.mxu0 %v321
    %405 = vmatpush.bf16.msra.mxu0 %v318
    %406 = vmatpush.bf16.msra.mxu0 %v315
    %407 = vmatmul.bf16.gmra.mxu0 %v229
    %v408 = vpop.f32.mrf.mxu0
    %v409 = vadd.f32 %v217, %v408
    %v410 = vpop.f32.mrf.mxu0
    %v411 = vadd.f32 %v217, %v410
    %412 = vmatmul.bf16.gmra.mxu0 %v230
    %v413 = vpop.f32.mrf.mxu0
    %v414 = vadd.f32 %v217, %v413
    %v415 = vpop.f32.mrf.mxu0
    %v416 = vadd.f32 %v217, %v415
    %417 = vdwg.mxu0
    %v418 = vpack.c.bf16 %v373, %v371
    %v419 = vpack.c.bf16 %v378, %v376
    %v420 = vpack.c.bf16 %v392, %v390
    %v421 = vpack.c.bf16 %v397, %v395
    %v422 = vpack.c.bf16 %v411, %v409
    %v423 = vpack.c.bf16 %v416, %v414
    %v424 = vld [vmem:[#allocation7] sm:$0xff]
    %v425 = vld [vmem:[#allocation7 + $0x8] sm:$0xff]
    %v426 = vld [vmem:[#allocation7 + $0x10] sm:$0xff]
    %v427 = vld [vmem:[#allocation7 + $0x18] sm:$0xff]
    %428 = vmatpush.bf16.xpose.msra.mxu0 0
    %429 = vmatpush.bf16.xpose.msra.mxu0 0
    %430 = vmatpush.bf16.xpose.msra.mxu0 0
    %431 = vmatpush.bf16.xpose.msra.mxu0 0
    %432 = vmatpush.bf16.xpose.msra.mxu0 0
    %433 = vmatpush.bf16.xpose.msra.mxu0 0
    %434 = vmatpush.bf16.xpose.msra.mxu0 %v421
    %435 = vmatpush.bf16.xpose.msra.mxu0 %v420
    %436 = vmatmul.bf16.gmra.mxu0 %v418
    %v437 = vpop.f32.mrf.mxu0
    %v438 = vadd.f32 %v424, %v437
    %v439 = vpop.f32.mrf.mxu0
    %v440 = vadd.f32 %v425, %v439
    %441 = vmatmul.bf16.gmra.mxu0 %v419
    %v442 = vpop.f32.mrf.mxu0
    %v443 = vadd.f32 %v426, %v442
    %v444 = vpop.f32.mrf.mxu0
    %v445 = vadd.f32 %v427, %v444
    %446 = vdwg.mxu0
    %v447 = vld [vmem:[#allocation5] sm:$0x1]
    %v449 = vperm.slane %v447, 0
    %v451 = vadd.f32 %v438, %v449
    %v452 = vadd.f32 %v440, %v449
    %v453 = vadd.f32 %v443, %v449
    %v454 = vadd.f32 %v445, %v449
    %vm455 = vcmask 261120
    %v456 = vsel %vm455, %v451, -inf
    %457 = vmax.xlane.f32.xlu0 %v456
    %v458 = vpop.xlane.xlu0 %457
    %v459 = vsel %vm455, %v452, -inf
    %460 = vmax.xlane.f32.xlu0 %v459
    %v461 = vpop.xlane.xlu0 %460
    %v462 = vsel %vm455, %v453, -inf
    %463 = vmax.xlane.f32.xlu0 %v462
    %v464 = vpop.xlane.xlu0 %463
    %v465 = vsel %vm455, %v454, -inf
    %466 = vmax.xlane.f32.xlu0 %v465
    %v467 = vpop.xlane.xlu0 %466
    %v468 = vsub.f32 %v451, %v458
    %v469 = vsub.f32 %v452, %v461
    %v470 = vsub.f32 %v453, %v464
    %v471 = vsub.f32 %v454, %v467
    %v472 = vmul.f32 %v468, 1.442695
    %v473 = vpow.pop %v472
    %v474 = vmul.f32 %v469, 1.442695
    %v475 = vpow.pop %v474
    %v476 = vmul.f32 %v470, 1.442695
    %v477 = vpow.pop %v476
    %v478 = vmul.f32 %v471, 1.442695
    %v479 = vpow.pop %v478
    %v480 = vsel %vm455, %v473, 0.0
    %481 = vadd.xlane.f32.xlu0 %v480
    %v482 = vpop.xlane.xlu0 %481
    %v483 = vsel %vm455, %v475, 0.0
    %484 = vadd.xlane.f32.xlu0 %v483
    %v485 = vpop.xlane.xlu0 %484
    %v486 = vsel %vm455, %v477, 0.0
    %487 = vadd.xlane.f32.xlu0 %v486
    %v488 = vpop.xlane.xlu0 %487
    %v489 = vsel %vm455, %v479, 0.0
    %490 = vadd.xlane.f32.xlu0 %v489
    %v491 = vpop.xlane.xlu0 %490
    %v492 = vpack.c.bf16 %v475, %v473
    %v493 = vpack.c.bf16 %v479, %v477
    %v495 = vsel %vm455, %v492, 0
    %v498 = vsel %vm455, %v493, 0
    %500 = vmatpush.bf16.msra.mxu0 0
    %501 = vmatpush.bf16.msra.mxu0 0
    %502 = vmatpush.bf16.msra.mxu0 0
    %503 = vmatpush.bf16.msra.mxu0 0
    %504 = vmatpush.bf16.msra.mxu0 0
    %505 = vmatpush.bf16.msra.mxu0 0
    %506 = vmatpush.bf16.msra.mxu0 %v423
    %507 = vmatpush.bf16.msra.mxu0 %v422
    %508 = vmatmul.bf16.gmra.mxu0 %v495
    %v509 = vpop.f32.mrf.mxu0
    %v510 = vadd.f32 0.0, %v509
    %v511 = vpop.f32.mrf.mxu0
    %v512 = vadd.f32 0.0, %v511
    %513 = vmatmul.bf16.gmra.mxu0 %v498
    %v514 = vpop.f32.mrf.mxu0
    %v515 = vadd.f32 0.0, %v514
    %v516 = vpop.f32.mrf.mxu0
    %v517 = vadd.f32 0.0, %v516
    %518 = vdwg.mxu0
    %v519 = vrcp.pop %v482
    %v520 = vrcp.pop %v485
    %v521 = vrcp.pop %v488
    %v522 = vrcp.pop %v491
    %v523 = vmul.f32 %v510, %v519
    %v524 = vmul.f32 %v512, %v520
    %v525 = vmul.f32 %v515, %v521
    %v526 = vmul.f32 %v517, %v522
    %v527 = vpack.c.bf16 %v524, %v523
    %v528 = vpack.c.bf16 %v526, %v525
    %v529 = vld [vmem:[#allocation10] sm:$0xf]
    %v530 = vld [vmem:[#allocation10 + $0x4] sm:$0xf]
    %v531 = vld [vmem:[#allocation10 + $0x8] sm:$0xf]
    %v532 = vld [vmem:[#allocation10 + $0xc] sm:$0xf]
    %v533 = vld [vmem:[#allocation10 + $0x10] sm:$0xf]
    %v534 = vld [vmem:[#allocation10 + $0x14] sm:$0xf]
    %v535 = vld [vmem:[#allocation10 + $0x18] sm:$0xf]
    %v536 = vld [vmem:[#allocation10 + $0x1c] sm:$0xf]
    %v537 = vld [vmem:[#allocation10 + $0x20] sm:$0xf]
    %v538 = vld [vmem:[#allocation10 + $0x24] sm:$0xf]
    %v539 = vld [vmem:[#allocation10 + $0x28] sm:$0xf]
    %v540 = vld [vmem:[#allocation10 + $0x2c] sm:$0xf]
    %v541 = vld [vmem:[#allocation10 + $0x30] sm:$0xf]
    %v542 = vld [vmem:[#allocation10 + $0x34] sm:$0xf]
    %v543 = vld [vmem:[#allocation10 + $0x38] sm:$0xf]
    %v544 = vld [vmem:[#allocation10 + $0x3c] sm:$0xf]
    %v545 = vld [vmem:[#allocation11] sm:$0x1]
    %v547 = vperm.slane %v545, 0
    %v565 = vunpack.c.l.b16 %v529
    %v566 = vunpack.c.l.b16 %v530
    %v567 = vunpack.c.l.b16 %v531
    %v568 = vunpack.c.l.b16 %v532
    %v569 = vunpack.c.l.b16 %v533
    %v570 = vunpack.c.l.b16 %v534
    %v571 = vunpack.c.l.b16 %v535
    %v572 = vunpack.c.l.b16 %v536
    %v573 = vunpack.c.l.b16 %v537
    %v574 = vunpack.c.l.b16 %v538
    %v575 = vunpack.c.l.b16 %v539
    %v576 = vunpack.c.l.b16 %v540
    %v577 = vunpack.c.l.b16 %v541
    %v578 = vunpack.c.l.b16 %v542
    %v579 = vunpack.c.l.b16 %v543
    %v580 = vunpack.c.l.b16 %v544
    %v581 = vpack.c.b16 %v566, %v565
    %v582 = vpack.c.b16 %v568, %v567
    %v583 = vpack.c.b16 %v570, %v569
    %v584 = vpack.c.b16 %v572, %v571
    %v585 = vpack.c.b16 %v574, %v573
    %v586 = vpack.c.b16 %v576, %v575
    %v587 = vpack.c.b16 %v578, %v577
    %v588 = vpack.c.b16 %v580, %v579
    %597 = vmatpush.bf16.msra.mxu0 %v588
    %598 = vmatpush.bf16.msra.mxu0 %v587
    %599 = vmatpush.bf16.msra.mxu0 %v586
    %600 = vmatpush.bf16.msra.mxu0 %v585
    %601 = vmatpush.bf16.msra.mxu0 %v584
    %602 = vmatpush.bf16.msra.mxu0 %v583
    %603 = vmatpush.bf16.msra.mxu0 %v582
    %604 = vmatpush.bf16.msra.mxu0 %v581
    %605 = vmatmul.bf16.gmra.mxu0 %v527
    %v606 = vpop.f32.mrf.mxu0
    %v607 = vadd.f32 %v547, %v606
    %v608 = vpop.f32.mrf.mxu0
    %v609 = vadd.f32 %v547, %v608
    %610 = vmatmul.bf16.gmra.mxu0 %v528
    %v611 = vpop.f32.mrf.mxu0
    %v612 = vadd.f32 %v547, %v611
    %v613 = vpop.f32.mrf.mxu0
    %v614 = vadd.f32 %v547, %v613
    %615 = vdwg.mxu0
    %v616 = vadd.f32 %v177, %v607
    %v617 = vadd.f32 %v178, %v609
    %v618 = vadd.f32 %v179, %v612
    %v619 = vadd.f32 %v180, %v614
    %v620 = vld [vmem:[%s7] sm:$0x1]
    %v621 = vld [vmem:[%s8] sm:$0x1]
    %622 = vadd.xlane.f32.xlu0 %v616
    %v623 = vpop.xlane.xlu0 %622
    %624 = vadd.xlane.f32.xlu0 %v617
    %v625 = vpop.xlane.xlu0 %624
    %626 = vadd.xlane.f32.xlu0 %v618
    %v627 = vpop.xlane.xlu0 %626
    %628 = vadd.xlane.f32.xlu0 %v619
    %v629 = vpop.xlane.xlu0 %628
    %v630 = vrcp.pop 128.0
    %v631 = vmul.f32 128.0, %v630
    %v632 = vsub.f32 1.0, %v631
    %v633 = vmul.f32 %v630, %v632
    %v634 = vadd.f32 %v630, %v633
    %vm635 = vweird.f32 %v630
    %v636 = vsel %vm635, %v630, %v634
    %v637 = vmul.f32 %v623, %v636
    %v638 = vmul.f32 %v625, %v636
    %v639 = vmul.f32 %v627, %v636
    %v640 = vmul.f32 %v629, %v636
    %v641 = vsub.f32 %v616, %v637
    %v642 = vsub.f32 %v617, %v638
    %v643 = vsub.f32 %v618, %v639
    %v644 = vsub.f32 %v619, %v640
    %v645 = vmul.f32 %v641, %v641
    %v646 = vmul.f32 %v642, %v642
    %v647 = vmul.f32 %v643, %v643
    %v648 = vmul.f32 %v644, %v644
    %649 = vadd.xlane.f32.xlu0 %v645
    %v650 = vpop.xlane.xlu0 %649
    %651 = vadd.xlane.f32.xlu0 %v646
    %v652 = vpop.xlane.xlu0 %651
    %653 = vadd.xlane.f32.xlu0 %v647
    %v654 = vpop.xlane.xlu0 %653
    %655 = vadd.xlane.f32.xlu0 %v648
    %v656 = vpop.xlane.xlu0 %655
    %v657 = vmul.f32 %v650, %v636
    %v658 = vmul.f32 %v652, %v636
    %v659 = vmul.f32 %v654, %v636
    %v660 = vmul.f32 %v656, %v636
    %v661 = vadd.f32 %v657, 1e-05
    %v662 = vadd.f32 %v658, 1e-05
    %v663 = vadd.f32 %v659, 1e-05
    %v664 = vadd.f32 %v660, 1e-05
    %v665 = vrsqrt.pop %v661
    %v666 = vmul.f32 %v665, %v661
    %v667 = vmul.f32 %v666, %v665
    %v668 = vmul.f32 0.5, %v667
    %v669 = vsub.f32 1.5, %v668
    %v670 = vmul.f32 %v665, %v669
    %vm671 = vweird.f32 %v661
    %vm672 = vweird.f32 %v665
    %vm673 = vmor %vm671, %vm672
    %v674 = vsel %vm673, %v665, %v670
    %v675 = vrsqrt.pop %v662
    %v676 = vmul.f32 %v675, %v662
    %v677 = vmul.f32 %v676, %v675
    %v678 = vmul.f32 0.5, %v677
    %v679 = vsub.f32 1.5, %v678
    %v680 = vmul.f32 %v675, %v679
    %vm681 = vweird.f32 %v662
    %vm682 = vweird.f32 %v675
    %vm683 = vmor %vm681, %vm682
    %v684 = vsel %vm683, %v675, %v680
    %v685 = vrsqrt.pop %v663
    %v686 = vmul.f32 %v685, %v663
    %v687 = vmul.f32 %v686, %v685
    %v688 = vmul.f32 0.5, %v687
    %v689 = vsub.f32 1.5, %v688
    %v690 = vmul.f32 %v685, %v689
    %vm691 = vweird.f32 %v663
    %vm692 = vweird.f32 %v685
    %vm693 = vmor %vm691, %vm692
    %v694 = vsel %vm693, %v685, %v690
    %v695 = vrsqrt.pop %v664
    %v696 = vmul.f32 %v695, %v664
    %v697 = vmul.f32 %v696, %v695
    %v698 = vmul.f32 0.5, %v697
    %v699 = vsub.f32 1.5, %v698
    %v700 = vmul.f32 %v695, %v699
    %vm701 = vweird.f32 %v664
    %vm702 = vweird.f32 %v695
    %vm703 = vmor %vm701, %vm702
    %v704 = vsel %vm703, %v695, %v700
    %v705 = vmul.f32 %v641, %v674
    %v706 = vmul.f32 %v642, %v684
    %v707 = vmul.f32 %v643, %v694
    %v708 = vmul.f32 %v644, %v704
    %v710 = vperm.slane %v620, 0
    %v712 = vmul.f32 %v705, %v710
    %v713 = vmul.f32 %v706, %v710
    %v714 = vmul.f32 %v707, %v710
    %v715 = vmul.f32 %v708, %v710
    %v717 = vperm.slane %v621, 0
    %v719 = vadd.f32 %v712, %v717
    %v720 = vadd.f32 %v713, %v717
    %v721 = vadd.f32 %v714, %v717
    %v722 = vadd.f32 %v715, %v717
    %v723 = vpack.c.bf16 %v720, %v719
    %v724 = vpack.c.bf16 %v722, %v721
    %v725 = vld [vmem:[#allocation13] sm:$0xff]
    %v726 = vld [vmem:[#allocation13 + $0x8] sm:$0xff]
    %v727 = vld [vmem:[#allocation13 + $0x10] sm:$0xff]
    %v728 = vld [vmem:[#allocation13 + $0x18] sm:$0xff]
    %v729 = vld [vmem:[#allocation13 + $0x20] sm:$0xff]
    %v730 = vld [vmem:[#allocation13 + $0x28] sm:$0xff]
    %v731 = vld [vmem:[#allocation13 + $0x30] sm:$0xff]
    %v732 = vld [vmem:[#allocation13 + $0x38] sm:$0xff]
    %v733 = vld [vmem:[#allocation13 + $0x40] sm:$0xff]
    %v734 = vld [vmem:[#allocation13 + $0x48] sm:$0xff]
    %v735 = vld [vmem:[#allocation13 + $0x50] sm:$0xff]
    %v736 = vld [vmem:[#allocation13 + $0x58] sm:$0xff]
    %v737 = vld [vmem:[#allocation13 + $0x60] sm:$0xff]
    %v738 = vld [vmem:[#allocation13 + $0x68] sm:$0xff]
    %v739 = vld [vmem:[#allocation13 + $0x70] sm:$0xff]
    %v740 = vld [vmem:[#allocation13 + $0x78] sm:$0xff]
    %v741 = vld [vmem:[%s10] sm:$0x3]
    %v743 = vperm.slane %v741, 0
    %v744 = vperm.slane %v741, 1
    %v763 = vunpack.c.l.b16 %v725
    %v764 = vunpack.c.h.b16 %v725
    %v765 = vunpack.c.l.b16 %v726
    %v766 = vunpack.c.h.b16 %v726
    %v767 = vunpack.c.l.b16 %v727
    %v768 = vunpack.c.h.b16 %v727
    %v769 = vunpack.c.l.b16 %v728
    %v770 = vunpack.c.h.b16 %v728
    %v771 = vunpack.c.l.b16 %v729
    %v772 = vunpack.c.h.b16 %v729
    %v773 = vunpack.c.l.b16 %v730
    %v774 = vunpack.c.h.b16 %v730
    %v775 = vunpack.c.l.b16 %v731
    %v776 = vunpack.c.h.b16 %v731
    %v777 = vunpack.c.l.b16 %v732
    %v778 = vunpack.c.h.b16 %v732
    %v779 = vunpack.c.l.b16 %v733
    %v780 = vunpack.c.h.b16 %v733
    %v781 = vunpack.c.l.b16 %v734
    %v782 = vunpack.c.h.b16 %v734
    %v783 = vunpack.c.l.b16 %v735
    %v784 = vunpack.c.h.b16 %v735
    %v785 = vunpack.c.l.b16 %v736
    %v786 = vunpack.c.h.b16 %v736
    %v787 = vunpack.c.l.b16 %v737
    %v788 = vunpack.c.h.b16 %v737
    %v789 = vunpack.c.l.b16 %v738
    %v790 = vunpack.c.h.b16 %v738
    %v791 = vunpack.c.l.b16 %v739
    %v792 = vunpack.c.h.b16 %v739
    %v793 = vunpack.c.l.b16 %v740
    %v794 = vunpack.c.h.b16 %v740
    %v795 = vpack.c.b16 %v765, %v763
    %v796 = vpack.c.b16 %v766, %v764
    %v797 = vpack.c.b16 %v769, %v767
    %v798 = vpack.c.b16 %v770, %v768
    %v799 = vpack.c.b16 %v773, %v771
    %v800 = vpack.c.b16 %v774, %v772
    %v801 = vpack.c.b16 %v777, %v775
    %v802 = vpack.c.b16 %v778, %v776
    %v803 = vpack.c.b16 %v781, %v779
    %v804 = vpack.c.b16 %v782, %v780
    %v805 = vpack.c.b16 %v785, %v783
    %v806 = vpack.c.b16 %v786, %v784
    %v807 = vpack.c.b16 %v789, %v787
    %v808 = vpack.c.b16 %v790, %v788
    %v809 = vpack.c.b16 %v793, %v791
    %v810 = vpack.c.b16 %v794, %v792
    %827 = vmatpush.bf16.msra.mxu0 %v809
    %828 = vmatpush.bf16.msra.mxu0 %v807
    %829 = vmatpush.bf16.msra.mxu0 %v805
    %830 = vmatpush.bf16.msra.mxu0 %v803
    %831 = vmatpush.bf16.msra.mxu0 %v801
    %832 = vmatpush.bf16.msra.mxu0 %v799
    %833 = vmatpush.bf16.msra.mxu0 %v797
    %834 = vmatpush.bf16.msra.mxu0 %v795
    %835 = vmatmul.bf16.gmra.mxu0 %v723
    %v836 = vpop.f32.mrf.mxu0
    %v837 = vadd.f32 %v743, %v836
    %v838 = vpop.f32.mrf.mxu0
    %v839 = vadd.f32 %v743, %v838
    %840 = vmatmul.bf16.gmra.mxu0 %v724
    %v841 = vpop.f32.mrf.mxu0
    %v842 = vadd.f32 %v743, %v841
    %v843 = vpop.f32.mrf.mxu0
    %v844 = vadd.f32 %v743, %v843
    %845 = vdwg.mxu0
    %846 = vmatpush.bf16.msra.mxu0 %v810
    %847 = vmatpush.bf16.msra.mxu0 %v808
    %848 = vmatpush.bf16.msra.mxu0 %v806
    %849 = vmatpush.bf16.msra.mxu0 %v804
    %850 = vmatpush.bf16.msra.mxu0 %v802
    %851 = vmatpush.bf16.msra.mxu0 %v800
    %852 = vmatpush.bf16.msra.mxu0 %v798
    %853 = vmatpush.bf16.msra.mxu0 %v796
    %854 = vmatmul.bf16.gmra.mxu0 %v723
    %v855 = vpop.f32.mrf.mxu0
    %v856 = vadd.f32 %v744, %v855
    %v857 = vpop.f32.mrf.mxu0
    %v858 = vadd.f32 %v744, %v857
    %859 = vmatmul.bf16.gmra.mxu0 %v724
    %v860 = vpop.f32.mrf.mxu0
    %v861 = vadd.f32 %v744, %v860
    %v862 = vpop.f32.mrf.mxu0
    %v863 = vadd.f32 %v744, %v862
    %864 = vdwg.mxu0
    %v865 = vmax.f32 %v837, 0.0
    %v866 = vmax.f32 %v856, 0.0
    %v867 = vmax.f32 %v839, 0.0
    %v868 = vmax.f32 %v858, 0.0
    %v869 = vmax.f32 %v842, 0.0
    %v870 = vmax.f32 %v861, 0.0
    %v871 = vmax.f32 %v844, 0.0
    %v872 = vmax.f32 %v863, 0.0
    %v873 = vpack.c.bf16 %v867, %v865
    %v874 = vpack.c.bf16 %v868, %v866
    %v875 = vpack.c.bf16 %v871, %v869
    %v876 = vpack.c.bf16 %v872, %v870
    %v877 = vld [vmem:[#allocation14] sm:$0xf]
    %v878 = vld [vmem:[#allocation14 + $0x4] sm:$0xf]
    %v879 = vld [vmem:[#allocation14 + $0x8] sm:$0xf]
    %v880 = vld [vmem:[#allocation14 + $0xc] sm:$0xf]
    %v881 = vld [vmem:[#allocation14 + $0x10] sm:$0xf]
    %v882 = vld [vmem:[#allocation14 + $0x14] sm:$0xf]
    %v883 = vld [vmem:[#allocation14 + $0x18] sm:$0xf]
    %v884 = vld [vmem:[#allocation14 + $0x1c] sm:$0xf]
    %v885 = vld [vmem:[#allocation14 + $0x20] sm:$0xf]
    %v886 = vld [vmem:[#allocation14 + $0x24] sm:$0xf]
    %v887 = vld [vmem:[#allocation14 + $0x28] sm:$0xf]
    %v888 = vld [vmem:[#allocation14 + $0x2c] sm:$0xf]
    %v889 = vld [vmem:[#allocation14 + $0x30] sm:$0xf]
    %v890 = vld [vmem:[#allocation14 + $0x34] sm:$0xf]
    %v891 = vld [vmem:[#allocation14 + $0x38] sm:$0xf]
    %v892 = vld [vmem:[#allocation14 + $0x3c] sm:$0xf]
    %v893 = vld [vmem:[#allocation14 + $0x40] sm:$0xf]
    %v894 = vld [vmem:[#allocation14 + $0x44] sm:$0xf]
    %v895 = vld [vmem:[#allocation14 + $0x48] sm:$0xf]
    %v896 = vld [vmem:[#allocation14 + $0x4c] sm:$0xf]
    %v897 = vld [vmem:[#allocation14 + $0x50] sm:$0xf]
    %v898 = vld [vmem:[#allocation14 + $0x54] sm:$0xf]
    %v899 = vld [vmem:[#allocation14 + $0x58] sm:$0xf]
    %v900 = vld [vmem:[#allocation14 + $0x5c] sm:$0xf]
    %v901 = vld [vmem:[#allocation14 + $0x60] sm:$0xf]
    %v902 = vld [vmem:[#allocation14 + $0x64] sm:$0xf]
    %v903 = vld [vmem:[#allocation14 + $0x68] sm:$0xf]
    %v904 = vld [vmem:[#allocation14 + $0x6c] sm:$0xf]
    %v905 = vld [vmem:[#allocation14 + $0x70] sm:$0xf]
    %v906 = vld [vmem:[#allocation14 + $0x74] sm:$0xf]
    %v907 = vld [vmem:[#allocation14 + $0x78] sm:$0xf]
    %v908 = vld [vmem:[#allocation14 + $0x7c] sm:$0xf]
    %v909 = vld [vmem:[%s12] sm:$0x1]
    %v911 = vperm.slane %v909, 0
    %v945 = vunpack.c.l.b16 %v877
    %v946 = vunpack.c.l.b16 %v878
    %v947 = vunpack.c.l.b16 %v879
    %v948 = vunpack.c.l.b16 %v880
    %v949 = vunpack.c.l.b16 %v881
    %v950 = vunpack.c.l.b16 %v882
    %v951 = vunpack.c.l.b16 %v883
    %v952 = vunpack.c.l.b16 %v884
    %v953 = vunpack.c.l.b16 %v885
    %v954 = vunpack.c.l.b16 %v886
    %v955 = vunpack.c.l.b16 %v887
    %v956 = vunpack.c.l.b16 %v888
    %v957 = vunpack.c.l.b16 %v889
    %v958 = vunpack.c.l.b16 %v890
    %v959 = vunpack.c.l.b16 %v891
    %v960 = vunpack.c.l.b16 %v892
    %v961 = vunpack.c.l.b16 %v893
    %v962 = vunpack.c.l.b16 %v894
    %v963 = vunpack.c.l.b16 %v895
    %v964 = vunpack.c.l.b16 %v896
    %v965 = vunpack.c.l.b16 %v897
    %v966 = vunpack.c.l.b16 %v898
    %v967 = vunpack.c.l.b16 %v899
    %v968 = vunpack.c.l.b16 %v900
    %v969 = vunpack.c.l.b16 %v901
    %v970 = vunpack.c.l.b16 %v902
    %v971 = vunpack.c.l.b16 %v903
    %v972 = vunpack.c.l.b16 %v904
    %v973 = vunpack.c.l.b16 %v905
    %v974 = vunpack.c.l.b16 %v906
    %v975 = vunpack.c.l.b16 %v907
    %v976 = vunpack.c.l.b16 %v908
    %v977 = vpack.c.b16 %v946, %v945
    %v978 = vpack.c.b16 %v948, %v947
    %v979 = vpack.c.b16 %v950, %v949
    %v980 = vpack.c.b16 %v952, %v951
    %v981 = vpack.c.b16 %v954, %v953
    %v982 = vpack.c.b16 %v956, %v955
    %v983 = vpack.c.b16 %v958, %v957
    %v984 = vpack.c.b16 %v960, %v959
    %v985 = vpack.c.b16 %v962, %v961
    %v986 = vpack.c.b16 %v964, %v963
    %v987 = vpack.c.b16 %v966, %v965
    %v988 = vpack.c.b16 %v968, %v967
    %v989 = vpack.c.b16 %v970, %v969
    %v990 = vpack.c.b16 %v972, %v971
    %v991 = vpack.c.b16 %v974, %v973
    %v992 = vpack.c.b16 %v976, %v975
    %1009 = vmatpush.bf16.msra.mxu0 %v984
    %1010 = vmatpush.bf16.msra.mxu0 %v983
    %1011 = vmatpush.bf16.msra.mxu0 %v982
    %1012 = vmatpush.bf16.msra.mxu0 %v981
    %1013 = vmatpush.bf16.msra.mxu0 %v980
    %1014 = vmatpush.bf16.msra.mxu0 %v979
    %1015 = vmatpush.bf16.msra.mxu0 %v978
    %1016 = vmatpush.bf16.msra.mxu0 %v977
    %1017 = vmatmul.bf16.gmra.mxu0 %v873
    %v1018 = vpop.f32.mrf.mxu0
    %v1019 = vadd.f32 %v911, %v1018
    %v1020 = vpop.f32.mrf.mxu0
    %v1021 = vadd.f32 %v911, %v1020
    %1022 = vmatmul.bf16.gmra.mxu0 %v875
    %v1023 = vpop.f32.mrf.mxu0
    %v1024 = vadd.f32 %v911, %v1023
    %v1025 = vpop.f32.mrf.mxu0
    %v1026 = vadd.f32 %v911, %v1025
    %1027 = vdwg.mxu0
    %1028 = vmatpush.bf16.msra.mxu0 %v992
    %1029 = vmatpush.bf16.msra.mxu0 %v991
    %1030 = vmatpush.bf16.msra.mxu0 %v990
    %1031 = vmatpush.bf16.msra.mxu0 %v989
    %1032 = vmatpush.bf16.msra.mxu0 %v988
    %1033 = vmatpush.bf16.msra.mxu0 %v987
    %1034 = vmatpush.bf16.msra.mxu0 %v986
    %1035 = vmatpush.bf16.msra.mxu0 %v985
    %1036 = vmatmul.bf16.gmra.mxu0 %v874
    %v1037 = vpop.f32.mrf.mxu0
    %v1038 = vadd.f32 %v1019, %v1037
    %v1039 = vpop.f32.mrf.mxu0
    %v1040 = vadd.f32 %v1021, %v1039
    %1041 = vmatmul.bf16.gmra.mxu0 %v876
    %v1042 = vpop.f32.mrf.mxu0
    %v1043 = vadd.f32 %v1024, %v1042
    %v1044 = vpop.f32.mrf.mxu0
    %v1045 = vadd.f32 %v1026, %v1044
    %1046 = vdwg.mxu0
    %v1047 = vadd.f32 %v719, %v1038
    %v1048 = vadd.f32 %v720, %v1040
    %v1049 = vadd.f32 %v721, %v1043
    %v1050 = vadd.f32 %v722, %v1045
    %v1051 = vld [vmem:[%s13] sm:$0x1]
    %v1052 = vld [vmem:[%s14] sm:$0x1]
    %1053 = vadd.xlane.f32.xlu0 %v1047
    %v1054 = vpop.xlane.xlu0 %1053
    %1055 = vadd.xlane.f32.xlu0 %v1048
    %v1056 = vpop.xlane.xlu0 %1055
    %1057 = vadd.xlane.f32.xlu0 %v1049
    %v1058 = vpop.xlane.xlu0 %1057
    %1059 = vadd.xlane.f32.xlu0 %v1050
    %v1060 = vpop.xlane.xlu0 %1059
    %v1061 = vmul.f32 %v1054, %v636
    %v1062 = vmul.f32 %v1056, %v636
    %v1063 = vmul.f32 %v1058, %v636
    %v1064 = vmul.f32 %v1060, %v636
    %v1065 = vsub.f32 %v1047, %v1061
    %v1066 = vsub.f32 %v1048, %v1062
    %v1067 = vsub.f32 %v1049, %v1063
    %v1068 = vsub.f32 %v1050, %v1064
    %v1069 = vmul.f32 %v1065, %v1065
    %v1070 = vmul.f32 %v1066, %v1066
    %v1071 = vmul.f32 %v1067, %v1067
    %v1072 = vmul.f32 %v1068, %v1068
    %1073 = vadd.xlane.f32.xlu0 %v1069
    %v1074 = vpop.xlane.xlu0 %1073
    %1075 = vadd.xlane.f32.xlu0 %v1070
    %v1076 = vpop.xlane.xlu0 %1075
    %1077 = vadd.xlane.f32.xlu0 %v1071
    %v1078 = vpop.xlane.xlu0 %1077
    %1079 = vadd.xlane.f32.xlu0 %v1072
    %v1080 = vpop.xlane.xlu0 %1079
    %v1081 = vmul.f32 %v1074, %v636
    %v1082 = vmul.f32 %v1076, %v636
    %v1083 = vmul.f32 %v1078, %v636
    %v1084 = vmul.f32 %v1080, %v636
    %v1085 = vadd.f32 %v1081, 1e-05
    %v1086 = vadd.f32 %v1082, 1e-05
    %v1087 = vadd.f32 %v1083, 1e-05
    %v1088 = vadd.f32 %v1084, 1e-05
    %v1089 = vrsqrt.pop %v1085
    %v1090 = vmul.f32 %v1089, %v1085
    %v1091 = vmul.f32 %v1090, %v1089
    %v1092 = vmul.f32 0.5, %v1091
    %v1093 = vsub.f32 1.5, %v1092
    %v1094 = vmul.f32 %v1089, %v1093
    %vm1095 = vweird.f32 %v1085
    %vm1096 = vweird.f32 %v1089
    %vm1097 = vmor %vm1095, %vm1096
    %v1098 = vsel %vm1097, %v1089, %v1094
    %v1099 = vrsqrt.pop %v1086
    %v1100 = vmul.f32 %v1099, %v1086
    %v1101 = vmul.f32 %v1100, %v1099
    %v1102 = vmul.f32 0.5, %v1101
    %v1103 = vsub.f32 1.5, %v1102
    %v1104 = vmul.f32 %v1099, %v1103
    %vm1105 = vweird.f32 %v1086
    %vm1106 = vweird.f32 %v1099
    %vm1107 = vmor %vm1105, %vm1106
    %v1108 = vsel %vm1107, %v1099, %v1104
    %v1109 = vrsqrt.pop %v1087
    %v1110 = vmul.f32 %v1109, %v1087
    %v1111 = vmul.f32 %v1110, %v1109
    %v1112 = vmul.f32 0.5, %v1111
    %v1113 = vsub.f32 1.5, %v1112
    %v1114 = vmul.f32 %v1109, %v1113
    %vm1115 = vweird.f32 %v1087
    %vm1116 = vweird.f32 %v1109
    %vm1117 = vmor %vm1115, %vm1116
    %v1118 = vsel %vm1117, %v1109, %v1114
    %v1119 = vrsqrt.pop %v1088
    %v1120 = vmul.f32 %v1119, %v1088
    %v1121 = vmul.f32 %v1120, %v1119
    %v1122 = vmul.f32 0.5, %v1121
    %v1123 = vsub.f32 1.5, %v1122
    %v1124 = vmul.f32 %v1119, %v1123
    %vm1125 = vweird.f32 %v1088
    %vm1126 = vweird.f32 %v1119
    %vm1127 = vmor %vm1125, %vm1126
    %v1128 = vsel %vm1127, %v1119, %v1124
    %v1129 = vmul.f32 %v1065, %v1098
    %v1130 = vmul.f32 %v1066, %v1108
    %v1131 = vmul.f32 %v1067, %v1118
    %v1132 = vmul.f32 %v1068, %v1128
    %v1134 = vperm.slane %v1051, 0
    %v1136 = vmul.f32 %v1129, %v1134
    %v1137 = vmul.f32 %v1130, %v1134
    %v1138 = vmul.f32 %v1131, %v1134
    %v1139 = vmul.f32 %v1132, %v1134
    %v1141 = vperm.slane %v1052, 0
    %v1143 = vadd.f32 %v1136, %v1141
    %v1144 = vadd.f32 %v1137, %v1141
    %v1145 = vadd.f32 %v1138, %v1141
    %v1146 = vadd.f32 %v1139, %v1141
    %1147 = vst [vmem:[#allocation16] sm:$0xff] %v1143
    %1148 = vst [vmem:[#allocation16 + $0x8] sm:$0xff] %v1144
    %1149 = vst [vmem:[#allocation16 + $0x10] sm:$0xff] %v1145
    %1150 = vst [vmem:[#allocation16 + $0x18] sm:$0xff] %v1146
    // Predicated region
    $region94: #{tpu_custom_call.1} parent=1 // pred_check
      _
    $region95: #{tpu_custom_call.1} parent=1 // pred_check_branch
      %1152 = sbr.rel (0) target = $region97
    $region96: #{tpu_custom_call.1} parent=1 // pred_region
      %1154 = vsyncadd [#allocation4], 0
      %s1155 = sshll.u32 [#allocation16], 4
      %s1156 = int_to_ptr.vmem [resolvable:$true] %s1155
      %s1157 = sshll.u32 %s15, 4
      %s1158 = int_to_ptr.hbm [resolvable:$true] %s1157
      %1163 = dma.vmem_to_hbm [thread:$0]  %s1156, 512, %s1158, [#allocation4], 128, 128, 8
    $region97: #{tpu_custom_call.1} parent=1 // pred_fallthru
      _
    // Predicated region
    $region98: #{tpu_custom_call.1} parent=1 // pred_check
      _
    $region99: #{tpu_custom_call.1} parent=1 // pred_check_branch
      %1165 = sbr.rel (0) target = $region101
    $region100: #{tpu_custom_call.1} parent=1 // pred_region
      %1167 = dma.done [#allocation4], 512
    $region101: #{tpu_custom_call.1} parent=1 // pred_fallthru
      _
    %1168 = vsyncpa [#allocation3], 1
    %1169 = vsyncpa [#allocation6], 1
    %1170 = vsyncpa [#allocation9], 1
    %1171 = vsyncpa [#allocation12], 1
    %1172 = vsyncpa [#allocation15], 1
    %1173 = vsyncpa [#allocation4], 1

</llo_original>
